<compile_context>
chip_gen: v6e
topology: v6e:2x2x1
jax: 0.10.0
libtpu: 0.0.40
codegen_flags: <defaults>
</compile_context>

<pallas_src>
import functools
import math

import jax
import jax.numpy as jnp
from jax import lax
from jax.experimental import pallas as pl
from jax.experimental.pallas import tpu as pltpu


# ----------------------------------------------------------------------------
# Helpers
# ----------------------------------------------------------------------------
def _mix_u32(v):
    """Cheap xorshift-multiply integer hash (lowbias32-style), uint32 wraparound."""
    v = (v ^ (v >> jnp.uint32(16))) * jnp.uint32(0x7FEB352D)
    v = (v ^ (v >> jnp.uint32(15))) * jnp.uint32(0x846CA68B)
    return v ^ (v >> jnp.uint32(16))


# ----------------------------------------------------------------------------
# Kernels
# ----------------------------------------------------------------------------
def _prng_dropout_kernel(seed_ref, x_ref, w1_ref, w2_ref, b2_ref, o_ref, *,
                         dropout_p: float, tile_s: int, n_total: int,
                         f_total: int, hw_prng: bool):
    """One grid step = (one N-tile) x (one tile of `tile_s` Monte-Carlo samples).

    seed_ref: (1,)      int32 scalar-prefetch seed (SMEM)
    x_ref:    (tn, F)   input features (resident across the inner sample sweep)
    w1_ref:   (ts, F)   elementwise-layer weight samples
    w2_ref:   (ts, F)   final linear weight samples (out_features == 1)
    b2_ref:   (ts, 1)   final bias samples
    o_ref:    (ts, tn)  logits for this (sample-tile, N-tile)
    """
    ts = tile_s

    if dropout_p >= 1.0:
        # F.dropout with p=1 zeroes all activations -> logits == bias samples.
        o_ref[...] = jnp.broadcast_to(b2_ref[...], o_ref.shape)
        return

    use_dropout = dropout_p > 0.0
    keep_prob = 1.0 - dropout_p

    x = x_ref[...]                                        # (tn, F)
    w1 = w1_ref[...]                                      # (ts, F)
    w2 = w2_ref[...]                                      # (ts, F)
    b2 = b2_ref[...]                                      # (ts, 1)
    if use_dropout:
        w2 = w2 * jnp.float32(1.0 / keep_prob)            # fold 1/keep once (hoisted)
    w2_cols = w2.T                                        # (F, ts): per-sample MXU RHS

    tn = x.shape[0]

    if use_dropout:
        # uint32 threshold s.t. P(bits < thr) == keep_prob (resolution ~2^-32;
        # keep_prob within 2^-33 of 1.0 clamps to (2^32-1)/2^32 -- negligible).
        thr = jnp.uint32(min(int(round(keep_prob * 2.0 ** 32)), 2 ** 32 - 1))
        if hw_prng:
            # Hardware PRNG: one distinct, well-mixed stream per grid step
            # (program ids folded into the seed, not consecutive integers).
            pltpu.prng_seed(seed_ref[0], pl.program_id(0), pl.program_id(1))
        else:
            # Portable counter-hash fallback (interpret / non-TPU backends).
            r = lax.broadcasted_iota(jnp.uint32, (tn, f_total), 0)
            c = lax.broadcasted_iota(jnp.uint32, (tn, f_total), 1)
            elem_idx = r * jnp.uint32(f_total) + c        # hoisted out of sample loop
            n_off = (pl.program_id(0) * tn).astype(jnp.uint32)
            seed_mix = seed_ref[0].astype(jnp.uint32) * jnp.uint32(0x9E3779B1)

    # Static unroll over the sample tile (ts defaults to 8; switch to
    # lax.fori_loop(..., unroll=True) if tile_s is raised well beyond 8).
    for i in range(ts):
        h = jnp.maximum(x * w1[i:i + 1, :], 0.0)          # (tn, F) = relu(x . w1_i)
        if use_dropout:
            if hw_prng:
                bits = pltpu.bitcast(pltpu.prng_random_bits(h.shape), jnp.uint32)
            else:
                s_glob = (pl.program_id(1) * ts + i).astype(jnp.uint32)
                base = ((s_glob * jnp.uint32(n_total) + n_off) * jnp.uint32(f_total)
                        + seed_mix)
                bits = _mix_u32(elem_idx + base)
            h = jnp.where(bits < thr, h, 0.0)
        # F -> 1 reduction on the MXU (frees the XLU, the previous bottleneck):
        col = jnp.dot(h, w2_cols[:, i:i + 1],
                      preferred_element_type=jnp.float32)  # (tn, 1)
        o_ref[i:i + 1, :] = col.T + b2[i:i + 1, :]         # lane-dense (1, tn) row store


def _masked_dropout_kernel(x_ref, w1_ref, w2_ref, b2_ref, mask_ref, o_ref, *,
                           dropout_p: float, tile_s: int):
    """Parity path (tests only): host-provided int8 keep-mask, bit-reproducible."""
    ts = tile_s

    if dropout_p >= 1.0:
        o_ref[...] = jnp.broadcast_to(b2_ref[...], o_ref.shape)
        return

    x = x_ref[...]                                        # (tn, F)
    w1 = w1_ref[...]                                      # (ts, F)
    w2 = w2_ref[...]                                      # (ts, F)
    b2 = b2_ref[...]                                      # (ts, 1)
    if dropout_p > 0.0:
        w2 = w2 * jnp.float32(1.0 / (1.0 - dropout_p))    # hoisted scaling
    w2_cols = w2.T                                        # (F, ts)

    for i in range(ts):
        h = jnp.maximum(x * w1[i:i + 1, :], 0.0)          # (tn, F)
        keep = mask_ref[i].astype(jnp.float32)            # (tn, F) int8 -> f32
        col = jnp.dot(h * keep, w2_cols[:, i:i + 1],
                      preferred_element_type=jnp.float32)  # (tn, 1) on the MXU
        o_ref[i:i + 1, :] = col.T + b2[i:i + 1, :]


# ----------------------------------------------------------------------------
# Wrappers
# ----------------------------------------------------------------------------
def _auto_tiles(N, S, tile_n, tile_s):
    if tile_n is None:
        if N <= 512:
            tile_n = N                                   # full N when small
        else:
            tile_n = next((c for c in (512, 256, 128) if N % c == 0), N)
    if tile_s is None:
        tile_s = 8 if S % 8 == 0 else S
    assert N % tile_n == 0 and S % tile_s == 0, "N/S must be divisible by tile sizes"
    return tile_n, tile_s


def _cost_estimate(N, F, S, tn, extra_bytes=0):
    n_tiles = max(N // tn, 1)
    flops = 5 * S * N * F
    bytes_accessed = 4 * (N * F + 2 * n_tiles * S * F + S * N + S) + extra_bytes
    return pl.CostEstimate(flops=flops, transcendentals=0,
                           bytes_accessed=bytes_accessed)


def bayes_ele_cox_forward(x, w1_s, w2_s, b2_s, seed, *, dropout_p,
                          tile_n=None, tile_s=None, use_hw_prng=None):
    """Production path: dropout mask generated in-kernel (no HBM mask stream).

    x: (N, F) f32; w1_s/w2_s: (S, F) f32; b2_s: (S, 1) f32; seed: (1,) int32.
    Returns (S, N) logits == PyTorch `outputs.squeeze(-1)`.
    """
    N, F = x.shape
    S = w1_s.shape[0]
    tn, ts = _auto_tiles(N, S, tile_n, tile_s)
    if use_hw_prng is None:
        use_hw_prng = jax.default_backend() == "tpu"      # HW PRNG only on real TPU

    kernel = functools.partial(_prng_dropout_kernel, dropout_p=float(dropout_p),
                               tile_s=ts, n_total=N, f_total=F,
                               hw_prng=bool(use_hw_prng))
    return pl.pallas_call(
        kernel,
        out_shape=jax.ShapeDtypeStruct((S, N), jnp.float32),
        grid_spec=pltpu.PrefetchScalarGridSpec(
            num_scalar_prefetch=1,
            grid=(N // tn, S // ts),          # N-tiles outer, sample-tiles inner
            in_specs=[
                pl.BlockSpec((tn, F), lambda n, s, sd: (n, 0)),  # x (resident over s)
                pl.BlockSpec((ts, F), lambda n, s, sd: (s, 0)),  # w1 sample tile
                pl.BlockSpec((ts, F), lambda n, s, sd: (s, 0)),  # w2 sample tile
                pl.BlockSpec((ts, 1), lambda n, s, sd: (s, 0)),  # b2 sample tile
            ],
            out_specs=pl.BlockSpec((ts, tn), lambda n, s, sd: (s, n)),
        ),
        compiler_params=pltpu.CompilerParams(
            dimension_semantics=("parallel", "arbitrary")),
        cost_estimate=_cost_estimate(N, F, S, tn),
    )(seed, x, w1_s, w2_s, b2_s)


def bayes_ele_cox_forward_masked(x, w1_s, w2_s, b2_s, keep_mask_i8, *, dropout_p,
                                 tile_n=None, tile_s=None):
    """Parity path (tests only): int8 keep-mask input streamed from HBM."""
    N, F = x.shape
    S = w1_s.shape[0]
    tn, ts = _auto_tiles(N, S, tile_n, tile_s)

    kernel = functools.partial(_masked_dropout_kernel,
                               dropout_p=float(dropout_p), tile_s=ts)
    return pl.pallas_call(
        kernel,
        out_shape=jax.ShapeDtypeStruct((S, N), jnp.float32),
        grid_spec=pltpu.PrefetchScalarGridSpec(
            num_scalar_prefetch=0,
            grid=(N // tn, S // ts),
            in_specs=[
                pl.BlockSpec((tn, F), lambda n, s: (n, 0)),          # x
                pl.BlockSpec((ts, F), lambda n, s: (s, 0)),          # w1
                pl.BlockSpec((ts, F), lambda n, s: (s, 0)),          # w2
                pl.BlockSpec((ts, 1), lambda n, s: (s, 0)),          # b2
                pl.BlockSpec((ts, tn, F), lambda n, s: (s, n, 0)),   # int8 keep mask
            ],
            out_specs=pl.BlockSpec((ts, tn), lambda n, s: (s, n)),
        ),
        compiler_params=pltpu.CompilerParams(
            dimension_semantics=("parallel", "arbitrary")),
        cost_estimate=_cost_estimate(N, F, S, tn, extra_bytes=S * N * F),
    )(x, w1_s, w2_s, b2_s, keep_mask_i8)


# ----------------------------------------------------------------------------
# Demo / self-test
# ----------------------------------------------------------------------------
if __name__ == "__main__":
    N, F, S = 256, 128, 16           # rows, in_features, n_samples
    dropout_p = 0.1
    rho_scale = -5.0                 # config.rho_scale
    # config.mu_scale is None -> l1 sets it to sqrt(6 / in_features); l2 reuses it.
    mu_scale = 1.0 * math.sqrt(6.0 / F)

    key = jax.random.PRNGKey(0)
    k_x, k_w1mu, k_eps1, k_w2mu, k_eps2, k_epsb, k_drop = jax.random.split(key, 7)

    x = jax.random.normal(k_x, (N, F), dtype=jnp.float32)

    # --- l1: BayesianElementwiseLinear(F) weight samples (S, F) ---
    w1_mu = jax.random.uniform(k_w1mu, (F,), minval=-mu_scale, maxval=mu_scale,
                               dtype=jnp.float32)
    w1_sigma = jnp.log1p(jnp.exp(jnp.full((F,), rho_scale, jnp.float32)))
    eps1 = jax.random.normal(k_eps1, (S, F), dtype=jnp.float32)
    w1_s = w1_mu[None, :] + w1_sigma[None, :] * eps1                     # (S, F)

    # --- l2: BayesianLinear(F, 1) weight/bias samples ---
    w2_mu = jax.random.uniform(k_w2mu, (1, F), minval=-mu_scale, maxval=mu_scale,
                               dtype=jnp.float32)
    w2_sigma = jnp.log1p(jnp.exp(jnp.full((1, F), rho_scale, jnp.float32)))
    eps2 = jax.random.normal(k_eps2, (S, 1, F), dtype=jnp.float32)
    w2_s = (w2_mu[None] + w2_sigma[None] * eps2)[:, 0, :]                # (S, F)

    b2_mu = jnp.zeros((1, 1), jnp.float32)
    b2_sigma = jnp.log1p(jnp.exp(jnp.full((1, 1), rho_scale, jnp.float32)))
    eps_b = jax.random.normal(k_epsb, (S, 1, 1), dtype=jnp.float32)
    b2_s = (b2_mu[None] + b2_sigma[None] * eps_b)[:, :, 0]               # (S, 1)

    seed = jnp.array([1234], dtype=jnp.int32)
    seed2 = jnp.array([99], dtype=jnp.int32)

    # --- pure-JAX references ---
    h_ref = jnp.maximum(x[None, :, :] * w1_s[:, None, :], 0.0)           # (S, N, F)
    ref_nodrop = jnp.sum(h_ref * w2_s[:, None, :], axis=-1) + b2_s       # (S, N)

    keep_prob = 1.0 - dropout_p
    keep_i8 = jax.random.bernoulli(k_drop, keep_prob, (S, N, F)).astype(jnp.int8)
    ref_masked = jnp.sum(h_ref * keep_i8.astype(jnp.float32) * (1.0 / keep_prob)
                         * w2_s[:, None, :], axis=-1) + b2_s             # (S, N)

    # 1) dropout disabled -> exact match to reference (default tiles, tn = N).
    out_nodrop = jax.block_until_ready(
        bayes_ele_cox_forward(x, w1_s, w2_s, b2_s, seed, dropout_p=0.0))
    assert out_nodrop.shape == (S, N)
    assert jnp.allclose(out_nodrop, ref_nodrop, atol=1e-4, rtol=1e-4)

    # 2) Parity path: host-provided int8 keep mask (multi-tile grid 2x2).
    out_masked = jax.block_until_ready(
        bayes_ele_cox_forward_masked(x, w1_s, w2_s, b2_s, keep_i8,
                                     dropout_p=dropout_p, tile_n=128, tile_s=8))
    assert jnp.allclose(out_masked, ref_masked, atol=1e-4, rtol=1e-4)

    # 3) Training path: dropout mask generated in-kernel (HW PRNG on TPU,
    #    portable counter-hash elsewhere).  Deterministic given the seed.
    out_prng = jax.block_until_ready(
        bayes_ele_cox_forward(x, w1_s, w2_s, b2_s, seed, dropout_p=dropout_p))
    out_prng_again = jax.block_until_ready(
        bayes_ele_cox_forward(x, w1_s, w2_s, b2_s, seed, dropout_p=dropout_p))
    out_prng_other = jax.block_until_ready(
        bayes_ele_cox_forward(x, w1_s, w2_s, b2_s, seed2, dropout_p=dropout_p))
    assert out_prng.shape == (S, N)
    assert bool(jnp.all(jnp.isfinite(out_prng)))
    assert bool(jnp.array_equal(out_prng, out_prng_again))        # reproducible
    assert not bool(jnp.array_equal(out_prng, out_prng_other))    # seed-dependent
    assert not bool(jnp.allclose(out_prng, ref_nodrop, atol=1e-6))  # dropout applied

    # 4) p == 1 edge case: everything dropped -> logits equal the bias samples.
    out_p1 = jax.block_until_ready(
        bayes_ele_cox_forward(x, w1_s, w2_s, b2_s, seed, dropout_p=1.0))
    assert jnp.allclose(out_p1, jnp.broadcast_to(b2_s, (S, N)), atol=1e-6)

    print("KERNEL_OK")
</pallas_src>

<mosaic_0001>
module attributes {stable_mosaic.version = 11 : i64} {
  func.func @_prng_dropout_kernel(%arg0: i32, %arg1: i32, %arg2: memref<1xi32, #tpu.memory_space<smem>>, %arg3: memref<256x128xf32, #tpu.memory_space<vmem>>, %arg4: memref<8x128xf32, #tpu.memory_space<vmem>>, %arg5: memref<8x128xf32, #tpu.memory_space<vmem>>, %arg6: memref<8x1xf32, #tpu.memory_space<vmem>>, %arg7: memref<8x256xf32, #tpu.memory_space<vmem>>) attributes {dimension_semantics = [#tpu.dimension_semantics<parallel>, #tpu.dimension_semantics<arbitrary>], iteration_bounds = array<i64: 1, 2>, scalar_prefetch = 1 : i64, scratch_operands = 0 : i64, tpu.core_type = #tpu.core_type<tc>, window_params = [{transform_indices = @transform_0, window_bounds = array<i64: 256, 128>}, {transform_indices = @transform_1, window_bounds = array<i64: 8, 128>}, {transform_indices = @transform_2, window_bounds = array<i64: 8, 128>}, {transform_indices = @transform_3, window_bounds = array<i64: 8, 1>}, {transform_indices = @transform_4, window_bounds = array<i64: 8, 256>}]} {
    %c0 = arith.constant 0 : index
    %c0_0 = arith.constant 0 : index
    %0 = vector.load %arg3[%c0, %c0_0] : memref<256x128xf32, #tpu.memory_space<vmem>>, vector<256x128xf32>
    %c0_1 = arith.constant 0 : index
    %c0_2 = arith.constant 0 : index
    %1 = vector.load %arg4[%c0_1, %c0_2] : memref<8x128xf32, #tpu.memory_space<vmem>>, vector<8x128xf32>
    %c0_3 = arith.constant 0 : index
    %c0_4 = arith.constant 0 : index
    %2 = vector.load %arg5[%c0_3, %c0_4] : memref<8x128xf32, #tpu.memory_space<vmem>>, vector<8x128xf32>
    %c0_5 = arith.constant 0 : index
    %c0_6 = arith.constant 0 : index
    %3 = vector.load %arg6[%c0_5, %c0_6] : memref<8x1xf32, #tpu.memory_space<vmem>>, vector<8x1xf32>
    %4 = tpu.transpose %2, [1, 0] : vector<8x128xf32> -> vector<128x8xf32>
    %5 = vector.extract_strided_slice %1 {offsets = [0, 0], sizes = [1, 128], strides = [1, 1]} : vector<8x128xf32> to vector<1x128xf32>
    %6 = vector.broadcast %5 : vector<1x128xf32> to vector<256x128xf32>
    %7 = arith.mulf %0, %6 : vector<256x128xf32>
    %cst = arith.constant 0.000000e+00 : f32
    %8 = vector.broadcast %cst : f32 to vector<256x128xf32>
    %9 = arith.maximumf %7, %8 : vector<256x128xf32>
    %10 = vector.extract_strided_slice %4 {offsets = [0, 0], sizes = [128, 1], strides = [1, 1]} : vector<128x8xf32> to vector<128x1xf32>
    %cst_7 = arith.constant dense<0.000000e+00> : vector<256x1xf32>
    %11 = tpu.matmul %9, %10, %cst_7 {dimension_numbers = #tpu.dot_dimension_numbers<[1], [0], [0], [1], [0, 0, 1, 1], [], []>} : vector<256x128xf32>, vector<128x1xf32>, vector<256x1xf32> -> vector<256x1xf32>
    %12 = tpu.transpose %11, [1, 0] : vector<256x1xf32> -> vector<1x256xf32>
    %13 = vector.extract_strided_slice %3 {offsets = [0, 0], sizes = [1, 1], strides = [1, 1]} : vector<8x1xf32> to vector<1x1xf32>
    %14 = vector.broadcast %13 : vector<1x1xf32> to vector<1x256xf32>
    %15 = arith.addf %12, %14 : vector<1x256xf32>
    %c0_8 = arith.constant 0 : index
    %c0_9 = arith.constant 0 : index
    %16 = vector.load %arg7[%c0_8, %c0_9] : memref<8x256xf32, #tpu.memory_space<vmem>>, vector<1x256xf32>
    tpu.vector_store %arg7[%c0_8, %c0_9], %15 {strides = array<i32>} : memref<8x256xf32, #tpu.memory_space<vmem>>, vector<1x256xf32>,
    %17 = vector.extract_strided_slice %1 {offsets = [1, 0], sizes = [1, 128], strides = [1, 1]} : vector<8x128xf32> to vector<1x128xf32>
    %18 = vector.broadcast %17 : vector<1x128xf32> to vector<256x128xf32>
    %19 = arith.mulf %0, %18 : vector<256x128xf32>
    %cst_10 = arith.constant 0.000000e+00 : f32
    %20 = vector.broadcast %cst_10 : f32 to vector<256x128xf32>
    %21 = arith.maximumf %19, %20 : vector<256x128xf32>
    %22 = vector.extract_strided_slice %4 {offsets = [0, 1], sizes = [128, 1], strides = [1, 1]} : vector<128x8xf32> to vector<128x1xf32>
    %cst_11 = arith.constant dense<0.000000e+00> : vector<256x1xf32>
    %23 = tpu.matmul %21, %22, %cst_11 {dimension_numbers = #tpu.dot_dimension_numbers<[1], [0], [0], [1], [0, 0, 1, 1], [], []>} : vector<256x128xf32>, vector<128x1xf32>, vector<256x1xf32> -> vector<256x1xf32>
    %24 = tpu.transpose %23, [1, 0] : vector<256x1xf32> -> vector<1x256xf32>
    %25 = vector.extract_strided_slice %3 {offsets = [1, 0], sizes = [1, 1], strides = [1, 1]} : vector<8x1xf32> to vector<1x1xf32>
    %26 = vector.broadcast %25 : vector<1x1xf32> to vector<1x256xf32>
    %27 = arith.addf %24, %26 : vector<1x256xf32>
    %c1 = arith.constant 1 : index
    %c0_12 = arith.constant 0 : index
    %28 = vector.load %arg7[%c1, %c0_12] : memref<8x256xf32, #tpu.memory_space<vmem>>, vector<1x256xf32>
    tpu.vector_store %arg7[%c1, %c0_12], %27 {strides = array<i32>} : memref<8x256xf32, #tpu.memory_space<vmem>>, vector<1x256xf32>,
    %29 = vector.extract_strided_slice %1 {offsets = [2, 0], sizes = [1, 128], strides = [1, 1]} : vector<8x128xf32> to vector<1x128xf32>
    %30 = vector.broadcast %29 : vector<1x128xf32> to vector<256x128xf32>
    %31 = arith.mulf %0, %30 : vector<256x128xf32>
    %cst_13 = arith.constant 0.000000e+00 : f32
    %32 = vector.broadcast %cst_13 : f32 to vector<256x128xf32>
    %33 = arith.maximumf %31, %32 : vector<256x128xf32>
    %34 = vector.extract_strided_slice %4 {offsets = [0, 2], sizes = [128, 1], strides = [1, 1]} : vector<128x8xf32> to vector<128x1xf32>
    %cst_14 = arith.constant dense<0.000000e+00> : vector<256x1xf32>
    %35 = tpu.matmul %33, %34, %cst_14 {dimension_numbers = #tpu.dot_dimension_numbers<[1], [0], [0], [1], [0, 0, 1, 1], [], []>} : vector<256x128xf32>, vector<128x1xf32>, vector<256x1xf32> -> vector<256x1xf32>
    %36 = tpu.transpose %35, [1, 0] : vector<256x1xf32> -> vector<1x256xf32>
    %37 = vector.extract_strided_slice %3 {offsets = [2, 0], sizes = [1, 1], strides = [1, 1]} : vector<8x1xf32> to vector<1x1xf32>
    %38 = vector.broadcast %37 : vector<1x1xf32> to vector<1x256xf32>
    %39 = arith.addf %36, %38 : vector<1x256xf32>
    %c2 = arith.constant 2 : index
    %c0_15 = arith.constant 0 : index
    %40 = vector.load %arg7[%c2, %c0_15] : memref<8x256xf32, #tpu.memory_space<vmem>>, vector<1x256xf32>
    tpu.vector_store %arg7[%c2, %c0_15], %39 {strides = array<i32>} : memref<8x256xf32, #tpu.memory_space<vmem>>, vector<1x256xf32>,
    %41 = vector.extract_strided_slice %1 {offsets = [3, 0], sizes = [1, 128], strides = [1, 1]} : vector<8x128xf32> to vector<1x128xf32>
    %42 = vector.broadcast %41 : vector<1x128xf32> to vector<256x128xf32>
    %43 = arith.mulf %0, %42 : vector<256x128xf32>
    %cst_16 = arith.constant 0.000000e+00 : f32
    %44 = vector.broadcast %cst_16 : f32 to vector<256x128xf32>
    %45 = arith.maximumf %43, %44 : vector<256x128xf32>
    %46 = vector.extract_strided_slice %4 {offsets = [0, 3], sizes = [128, 1], strides = [1, 1]} : vector<128x8xf32> to vector<128x1xf32>
    %cst_17 = arith.constant dense<0.000000e+00> : vector<256x1xf32>
    %47 = tpu.matmul %45, %46, %cst_17 {dimension_numbers = #tpu.dot_dimension_numbers<[1], [0], [0], [1], [0, 0, 1, 1], [], []>} : vector<256x128xf32>, vector<128x1xf32>, vector<256x1xf32> -> vector<256x1xf32>
    %48 = tpu.transpose %47, [1, 0] : vector<256x1xf32> -> vector<1x256xf32>
    %49 = vector.extract_strided_slice %3 {offsets = [3, 0], sizes = [1, 1], strides = [1, 1]} : vector<8x1xf32> to vector<1x1xf32>
    %50 = vector.broadcast %49 : vector<1x1xf32> to vector<1x256xf32>
    %51 = arith.addf %48, %50 : vector<1x256xf32>
    %c3 = arith.constant 3 : index
    %c0_18 = arith.constant 0 : index
    %52 = vector.load %arg7[%c3, %c0_18] : memref<8x256xf32, #tpu.memory_space<vmem>>, vector<1x256xf32>
    tpu.vector_store %arg7[%c3, %c0_18], %51 {strides = array<i32>} : memref<8x256xf32, #tpu.memory_space<vmem>>, vector<1x256xf32>,
    %53 = vector.extract_strided_slice %1 {offsets = [4, 0], sizes = [1, 128], strides = [1, 1]} : vector<8x128xf32> to vector<1x128xf32>
    %54 = vector.broadcast %53 : vector<1x128xf32> to vector<256x128xf32>
    %55 = arith.mulf %0, %54 : vector<256x128xf32>
    %cst_19 = arith.constant 0.000000e+00 : f32
    %56 = vector.broadcast %cst_19 : f32 to vector<256x128xf32>
    %57 = arith.maximumf %55, %56 : vector<256x128xf32>
    %58 = vector.extract_strided_slice %4 {offsets = [0, 4], sizes = [128, 1], strides = [1, 1]} : vector<128x8xf32> to vector<128x1xf32>
    %cst_20 = arith.constant dense<0.000000e+00> : vector<256x1xf32>
    %59 = tpu.matmul %57, %58, %cst_20 {dimension_numbers = #tpu.dot_dimension_numbers<[1], [0], [0], [1], [0, 0, 1, 1], [], []>} : vector<256x128xf32>, vector<128x1xf32>, vector<256x1xf32> -> vector<256x1xf32>
    %60 = tpu.transpose %59, [1, 0] : vector<256x1xf32> -> vector<1x256xf32>
    %61 = vector.extract_strided_slice %3 {offsets = [4, 0], sizes = [1, 1], strides = [1, 1]} : vector<8x1xf32> to vector<1x1xf32>
    %62 = vector.broadcast %61 : vector<1x1xf32> to vector<1x256xf32>
    %63 = arith.addf %60, %62 : vector<1x256xf32>
    %c4 = arith.constant 4 : index
    %c0_21 = arith.constant 0 : index
    %64 = vector.load %arg7[%c4, %c0_21] : memref<8x256xf32, #tpu.memory_space<vmem>>, vector<1x256xf32>
    tpu.vector_store %arg7[%c4, %c0_21], %63 {strides = array<i32>} : memref<8x256xf32, #tpu.memory_space<vmem>>, vector<1x256xf32>,
    %65 = vector.extract_strided_slice %1 {offsets = [5, 0], sizes = [1, 128], strides = [1, 1]} : vector<8x128xf32> to vector<1x128xf32>
    %66 = vector.broadcast %65 : vector<1x128xf32> to vector<256x128xf32>
    %67 = arith.mulf %0, %66 : vector<256x128xf32>
    %cst_22 = arith.constant 0.000000e+00 : f32
    %68 = vector.broadcast %cst_22 : f32 to vector<256x128xf32>
    %69 = arith.maximumf %67, %68 : vector<256x128xf32>
    %70 = vector.extract_strided_slice %4 {offsets = [0, 5], sizes = [128, 1], strides = [1, 1]} : vector<128x8xf32> to vector<128x1xf32>
    %cst_23 = arith.constant dense<0.000000e+00> : vector<256x1xf32>
    %71 = tpu.matmul %69, %70, %cst_23 {dimension_numbers = #tpu.dot_dimension_numbers<[1], [0], [0], [1], [0, 0, 1, 1], [], []>} : vector<256x128xf32>, vector<128x1xf32>, vector<256x1xf32> -> vector<256x1xf32>
    %72 = tpu.transpose %71, [1, 0] : vector<256x1xf32> -> vector<1x256xf32>
    %73 = vector.extract_strided_slice %3 {offsets = [5, 0], sizes = [1, 1], strides = [1, 1]} : vector<8x1xf32> to vector<1x1xf32>
    %74 = vector.broadcast %73 : vector<1x1xf32> to vector<1x256xf32>
    %75 = arith.addf %72, %74 : vector<1x256xf32>
    %c5 = arith.constant 5 : index
    %c0_24 = arith.constant 0 : index
    %76 = vector.load %arg7[%c5, %c0_24] : memref<8x256xf32, #tpu.memory_space<vmem>>, vector<1x256xf32>
    tpu.vector_store %arg7[%c5, %c0_24], %75 {strides = array<i32>} : memref<8x256xf32, #tpu.memory_space<vmem>>, vector<1x256xf32>,
    %77 = vector.extract_strided_slice %1 {offsets = [6, 0], sizes = [1, 128], strides = [1, 1]} : vector<8x128xf32> to vector<1x128xf32>
    %78 = vector.broadcast %77 : vector<1x128xf32> to vector<256x128xf32>
    %79 = arith.mulf %0, %78 : vector<256x128xf32>
    %cst_25 = arith.constant 0.000000e+00 : f32
    %80 = vector.broadcast %cst_25 : f32 to vector<256x128xf32>
    %81 = arith.maximumf %79, %80 : vector<256x128xf32>
    %82 = vector.extract_strided_slice %4 {offsets = [0, 6], sizes = [128, 1], strides = [1, 1]} : vector<128x8xf32> to vector<128x1xf32>
    %cst_26 = arith.constant dense<0.000000e+00> : vector<256x1xf32>
    %83 = tpu.matmul %81, %82, %cst_26 {dimension_numbers = #tpu.dot_dimension_numbers<[1], [0], [0], [1], [0, 0, 1, 1], [], []>} : vector<256x128xf32>, vector<128x1xf32>, vector<256x1xf32> -> vector<256x1xf32>
    %84 = tpu.transpose %83, [1, 0] : vector<256x1xf32> -> vector<1x256xf32>
    %85 = vector.extract_strided_slice %3 {offsets = [6, 0], sizes = [1, 1], strides = [1, 1]} : vector<8x1xf32> to vector<1x1xf32>
    %86 = vector.broadcast %85 : vector<1x1xf32> to vector<1x256xf32>
    %87 = arith.addf %84, %86 : vector<1x256xf32>
    %c6 = arith.constant 6 : index
    %c0_27 = arith.constant 0 : index
    %88 = vector.load %arg7[%c6, %c0_27] : memref<8x256xf32, #tpu.memory_space<vmem>>, vector<1x256xf32>
    tpu.vector_store %arg7[%c6, %c0_27], %87 {strides = array<i32>} : memref<8x256xf32, #tpu.memory_space<vmem>>, vector<1x256xf32>,
    %89 = vector.extract_strided_slice %1 {offsets = [7, 0], sizes = [1, 128], strides = [1, 1]} : vector<8x128xf32> to vector<1x128xf32>
    %90 = vector.broadcast %89 : vector<1x128xf32> to vector<256x128xf32>
    %91 = arith.mulf %0, %90 : vector<256x128xf32>
    %cst_28 = arith.constant 0.000000e+00 : f32
    %92 = vector.broadcast %cst_28 : f32 to vector<256x128xf32>
    %93 = arith.maximumf %91, %92 : vector<256x128xf32>
    %94 = vector.extract_strided_slice %4 {offsets = [0, 7], sizes = [128, 1], strides = [1, 1]} : vector<128x8xf32> to vector<128x1xf32>
    %cst_29 = arith.constant dense<0.000000e+00> : vector<256x1xf32>
    %95 = tpu.matmul %93, %94, %cst_29 {dimension_numbers = #tpu.dot_dimension_numbers<[1], [0], [0], [1], [0, 0, 1, 1], [], []>} : vector<256x128xf32>, vector<128x1xf32>, vector<256x1xf32> -> vector<256x1xf32>
    %96 = tpu.transpose %95, [1, 0] : vector<256x1xf32> -> vector<1x256xf32>
    %97 = vector.extract_strided_slice %3 {offsets = [7, 0], sizes = [1, 1], strides = [1, 1]} : vector<8x1xf32> to vector<1x1xf32>
    %98 = vector.broadcast %97 : vector<1x1xf32> to vector<1x256xf32>
    %99 = arith.addf %96, %98 : vector<1x256xf32>
    %c7 = arith.constant 7 : index
    %c0_30 = arith.constant 0 : index
    %100 = vector.load %arg7[%c7, %c0_30] : memref<8x256xf32, #tpu.memory_space<vmem>>, vector<1x256xf32>
    tpu.vector_store %arg7[%c7, %c0_30], %99 {strides = array<i32>} : memref<8x256xf32, #tpu.memory_space<vmem>>, vector<1x256xf32>,
    return
  }
  func.func @transform_0(%arg0: i32, %arg1: i32, %arg2: memref<1xi32, #tpu.memory_space<smem>>) -> (i32, i32) {
    %c0_i32 = arith.constant 0 : i32
    %c0_i32_0 = arith.constant 0 : i32
    return %arg0, %c0_i32 : i32, i32
  }
  func.func @transform_1(%arg0: i32, %arg1: i32, %arg2: memref<1xi32, #tpu.memory_space<smem>>) -> (i32, i32) {
    %c0_i32 = arith.constant 0 : i32
    %c0_i32_0 = arith.constant 0 : i32
    return %arg1, %c0_i32 : i32, i32
  }
  func.func @transform_2(%arg0: i32, %arg1: i32, %arg2: memref<1xi32, #tpu.memory_space<smem>>) -> (i32, i32) {
    %c0_i32 = arith.constant 0 : i32
    %c0_i32_0 = arith.constant 0 : i32
    return %arg1, %c0_i32 : i32, i32
  }
  func.func @transform_3(%arg0: i32, %arg1: i32, %arg2: memref<1xi32, #tpu.memory_space<smem>>) -> (i32, i32) {
    %c0_i32 = arith.constant 0 : i32
    %c0_i32_0 = arith.constant 0 : i32
    return %arg1, %c0_i32 : i32, i32
  }
  func.func @transform_4(%arg0: i32, %arg1: i32, %arg2: memref<1xi32, #tpu.memory_space<smem>>) -> (i32, i32) {
    %c0_i32 = arith.constant 0 : i32
    return %arg1, %arg0 : i32, i32
  }
}

</mosaic_0001>

<llo_original>
// kernel: tpu_custom_call.1
$region0: #{tpu_custom_call.1}
  #allocation0 [shape = 'u32[]', space=smem, size = 0x4, offset = 0x4, fixed_abs, tag = 'smem constant byte address 0x4 - core index']
  #allocation1 [shape = 'u32[144,128]{1,0:T(1,128)}', space=vmem, size = 0x12000, scoped, tag = 'internal scratch']
  #allocation2 [shape = 's32[1]{0}', space=sflag, size = 0x4, scoped, tag = 'scoped memory for tpu_custom_call.1']
  #allocation3 [shape = 's32[1]{0:T(128)S(6)}', space=smem, size = 0x200, scoped, tag = 'prefetched SMEM operand 0']
  %s0 = inlined_call_operand.<no memory space> [shape: s32[1], index: 0, kind: input, shape index: {}]
  %s1 = inlined_call_operand.hbm [shape: f32[256,128], index: 1, kind: input, shape index: {}]
  %s2 = inlined_call_operand.vmem [shape: f32[16,128], index: 2, kind: input, shape index: {}]
  %s3 = inlined_call_operand.hbm [shape: f32[16,128], index: 3, kind: input, shape index: {}]
  %s4 = inlined_call_operand.vmem [shape: f32[16,1], index: 4, kind: input, shape index: {}]
  %s5 = inlined_call_operand.hbm [shape: f32[16,256], index: 5, kind: output, shape index: {}]
  %s6 = sld [smem:[#allocation0]]
  $region57: #{tpu_custom_call.1} parent=0
    _
  %s8 = ssub.s32 1, %s6
  %s9 = scalar_select 0, %s8, %s6
  %10 = sst [smem:[#allocation3]] %s0
  $region1: #{tpu_custom_call.1} parent=0
    #allocation4 [shape = 'u8[131072]{0}', space=vmem, size = 0x20000, scoped, tag = 'input window, operand 1, single buffered']
    #allocation5 [shape = 's32[2]{0}', space=sflag, size = 0x8, scoped, tag = 'scoped memory for tpu_custom_call.1']
    #allocation6 [shape = 's32[2]{0}', space=sflag, size = 0x8, scoped, tag = 'scoped memory for tpu_custom_call.1']
    #allocation7 [shape = 'u8[8192]{0}', space=vmem, size = 0x2000, scoped, tag = 'input window, operand 3']
    #allocation8 [shape = 's32[2]{0}', space=sflag, size = 0x8, scoped, tag = 'scoped memory for tpu_custom_call.1']
    #allocation9 [shape = 'u8[16384]{0}', space=vmem, size = 0x4000, scoped, tag = 'output window, operand 0']
    %11 = vsyncpa [#allocation5], 0
    %12 = vsyncpa [#allocation8], 0
    %s13 = scalar_lea.sflag [#allocation8], 1
    %14 = vsyncpa %s13, 0
    %15 = vsyncpa [#allocation6], 0
    %s16 = scalar_lea.sflag [#allocation6], 1
    %17 = vsyncpa %s16, 0
    loop: start=0, step=1, limit=4
    $region2: #{tpu_custom_call.1} parent=1 // loop_pre_header
      _
    $region3: #{tpu_custom_call.1} parent=1 // loop_header
      %s19 = sphi 0, %s23
      %p20 = scmp.ge.s32.totalorder %s19, 4
      %s26 = sphi 0, %s38
      %s27 = sphi 0, %s34
      %s28 = sphi 0, %s26
      %s29 = sphi 0, %s27
      %s30 = sphi 0, %s28
      %s31 = sphi 0, %s29
      %s41 = sphi 0, %s43
      %s44 = sphi 0, %s41
      %s45 = sphi 0, %s44
      %s61 = sphi 0, %s45
      %s67 = sphi 0, %s69
      %s70 = sphi 0, %s67
      %s71 = sphi 0, %s70
      %s87 = sphi 0, %s71
      %s93 = sphi 0, %s95
      %s96 = sphi 0, %s93
      %s97 = sphi 0, %s96
      %s113 = sphi 0, %s97
      %s119 = sphi 0, %s121
      %s122 = sphi 0, %s119
      %s123 = sphi 0, %s122
      %s139 = sphi 0, %s123
      %s147 = sphi 0, %s149
      %s150 = sphi 0, %s147
      %s151 = sphi 0, %s150
      %s167 = sphi 0, %s151
    $region4: #{tpu_custom_call.1} parent=1 // loop_header_branch
      %22 = sbr.rel (%p20) target = $region8
    $region5: #{tpu_custom_call.1} parent=1 // loop_body
      %s24 = ssub.s32 %s19, 1
      %s25 = ssub.s32 %s19, 2
      %s32 = sadd.s32 1, %s27
      %p33 = scmp.ge.s32.totalorder %s32, 2
      %s34 = scalar_select %p33, 0, %s32
      %s35 = sadd.s32 1, %s26
      %s36 = scalar_select %p33, %s35, %s26
      %p37 = scmp.ge.s32.totalorder %s36, 1
      %s38 = scalar_select %p37, 0, %s36
      %s39 = ssub.s32 %s26, %s38
      %p40 = scmp.eq.s32.totalorder %s39, 0
      %s42 = sadd.s32 %s41, 1
      %s43 = scalar_select %p40, %s41, %s42
      %p46 = pneg %p40
      %p47 = scmp.eq.s32.totalorder %s19, 1
      %p48 = por %p46, %p47
      %p49 = scmp.ne.s32.totalorder %s41, %s44
      %p50 = scmp.eq.s32.totalorder %s19, 0
      %p51 = por %p49, %p50
      %p52 = scmp.ne.s32.totalorder %s41, %s44
      %p53 = scmp.eq.s32.totalorder %s24, 1
      %p54 = por %p52, %p53
      %p55 = scmp.ne.s32.totalorder %s44, %s45
      %p56 = scmp.eq.s32.totalorder %s24, 0
      %p57 = por %p55, %p56
      %p58 = scmp.ne.s32.totalorder %s44, %s45
      %p59 = scmp.eq.s32.totalorder %s25, 1
      %p60 = por %p58, %p59
      %p62 = scmp.ne.s32.totalorder %s45, %s61
      %p63 = scmp.eq.s32.totalorder %s25, 0
      %p64 = por %p62, %p63
      %s65 = ssub.s32 %s27, %s34
      %p66 = scmp.eq.s32.totalorder %s65, 0
      %s68 = sadd.s32 %s67, 1
      %s69 = scalar_select %p66, %s67, %s68
      %p72 = pneg %p66
      %p73 = scmp.eq.s32.totalorder %s19, 1
      %p74 = por %p72, %p73
      %p75 = scmp.ne.s32.totalorder %s67, %s70
      %p76 = scmp.eq.s32.totalorder %s19, 0
      %p77 = por %p75, %p76
      %p78 = scmp.ne.s32.totalorder %s67, %s70
      %p79 = scmp.eq.s32.totalorder %s24, 1
      %p80 = por %p78, %p79
      %p81 = scmp.ne.s32.totalorder %s70, %s71
      %p82 = scmp.eq.s32.totalorder %s24, 0
      %p83 = por %p81, %p82
      %p84 = scmp.ne.s32.totalorder %s70, %s71
      %p85 = scmp.eq.s32.totalorder %s25, 1
      %p86 = por %p84, %p85
      %p88 = scmp.ne.s32.totalorder %s71, %s87
      %p89 = scmp.eq.s32.totalorder %s25, 0
      %p90 = por %p88, %p89
      %s91 = ssub.s32 %s27, %s34
      %p92 = scmp.eq.s32.totalorder %s91, 0
      %s94 = sadd.s32 %s93, 1
      %s95 = scalar_select %p92, %s93, %s94
      %p98 = pneg %p92
      %p99 = scmp.eq.s32.totalorder %s19, 1
      %p100 = por %p98, %p99
      %p101 = scmp.ne.s32.totalorder %s93, %s96
      %p102 = scmp.eq.s32.totalorder %s19, 0
      %p103 = por %p101, %p102
      %p104 = scmp.ne.s32.totalorder %s93, %s96
      %p105 = scmp.eq.s32.totalorder %s24, 1
      %p106 = por %p104, %p105
      %p107 = scmp.ne.s32.totalorder %s96, %s97
      %p108 = scmp.eq.s32.totalorder %s24, 0
      %p109 = por %p107, %p108
      %p110 = scmp.ne.s32.totalorder %s96, %s97
      %p111 = scmp.eq.s32.totalorder %s25, 1
      %p112 = por %p110, %p111
      %p114 = scmp.ne.s32.totalorder %s97, %s113
      %p115 = scmp.eq.s32.totalorder %s25, 0
      %p116 = por %p114, %p115
      %s117 = ssub.s32 %s27, %s34
      %p118 = scmp.eq.s32.totalorder %s117, 0
      %s120 = sadd.s32 %s119, 1
      %s121 = scalar_select %p118, %s119, %s120
      %p124 = pneg %p118
      %p125 = scmp.eq.s32.totalorder %s19, 1
      %p126 = por %p124, %p125
      %p127 = scmp.ne.s32.totalorder %s119, %s122
      %p128 = scmp.eq.s32.totalorder %s19, 0
      %p129 = por %p127, %p128
      %p130 = scmp.ne.s32.totalorder %s119, %s122
      %p131 = scmp.eq.s32.totalorder %s24, 1
      %p132 = por %p130, %p131
      %p133 = scmp.ne.s32.totalorder %s122, %s123
      %p134 = scmp.eq.s32.totalorder %s24, 0
      %p135 = por %p133, %p134
      %p136 = scmp.ne.s32.totalorder %s122, %s123
      %p137 = scmp.eq.s32.totalorder %s25, 1
      %p138 = por %p136, %p137
      %p140 = scmp.ne.s32.totalorder %s123, %s139
      %p141 = scmp.eq.s32.totalorder %s25, 0
      %p142 = por %p140, %p141
      %s143 = ssub.s32 %s27, %s34
      %s144 = ssub.s32 %s26, %s38
      %s145 = sor.u32 %s143, %s144
      %p146 = scmp.eq.s32.totalorder %s145, 0
      %s148 = sadd.s32 %s147, 1
      %s149 = scalar_select %p146, %s147, %s148
      %p152 = pneg %p146
      %p153 = scmp.eq.s32.totalorder %s19, 1
      %p154 = por %p152, %p153
      %p155 = scmp.ne.s32.totalorder %s147, %s150
      %p156 = scmp.eq.s32.totalorder %s19, 0
      %p157 = por %p155, %p156
      %p158 = scmp.ne.s32.totalorder %s147, %s150
      %p159 = scmp.eq.s32.totalorder %s24, 1
      %p160 = por %p158, %p159
      %p161 = scmp.ne.s32.totalorder %s150, %s151
      %p162 = scmp.eq.s32.totalorder %s24, 0
      %p163 = por %p161, %p162
      %p164 = scmp.ne.s32.totalorder %s150, %s151
      %p165 = scmp.eq.s32.totalorder %s25, 1
      %p166 = por %p164, %p165
      %p168 = scmp.ne.s32.totalorder %s151, %s167
      %p169 = scmp.eq.s32.totalorder %s25, 0
      %p170 = por %p168, %p169
      %p171 = scmp.le.s32.totalorder 1, %s19
      %p172 = scmp.lt.s32.totalorder %s19, 3
      %p173 = pnand %p171, %p172
      %p174 = pneg %p173
      // Predicated region
      $region9: #{tpu_custom_call.1} parent=5 // pred_check
        _
      $region10: #{tpu_custom_call.1} parent=5 // pred_check_branch
        %176 = sbr.rel (%p173) target = $region12
      $region11: #{tpu_custom_call.1} parent=5 // pred_region
        %s177 = ssub.s32 %s19, 1
        // Predicated region
        $region13: #{tpu_custom_call.1} parent=11 // pred_check
          %p178 = pneg %p57
        $region14: #{tpu_custom_call.1} parent=11 // pred_check_branch
          %180 = sbr.rel (%p178) target = $region16
        $region15: #{tpu_custom_call.1} parent=11 // pred_region
          %s181 = smul.u32 32, %s28
          %s183 = ssub.s32 4096, 4096
          %184 = vsyncadd [#allocation5], %s183
          %s185 = smul.addr %s181, 128
          %s186 = scalar_lea.hbm %s1, %s185
          %s187 = sshll.u32 [#allocation4], 4
          %s188 = int_to_ptr.vmem [resolvable:$true] %s187
          %193 = dma.hbm_to_vmem [thread:$0]  %s186, 4096, %s188, [#allocation5], 128, 128, 8
        $region16: #{tpu_custom_call.1} parent=11 // pred_fallthru
          _
      $region12: #{tpu_custom_call.1} parent=5 // pred_fallthru
        _
      %p194 = scmp.lt.s32.totalorder %s19, 2
      // Predicated region
      $region17: #{tpu_custom_call.1} parent=5 // pred_check
        %p195 = pneg %p194
      $region18: #{tpu_custom_call.1} parent=5 // pred_check_branch
        %197 = sbr.rel (%p195) target = $region20
      $region19: #{tpu_custom_call.1} parent=5 // pred_region
        // Predicated region
        $region21: #{tpu_custom_call.1} parent=19 // pred_check
          %p198 = pneg %p77
        $region22: #{tpu_custom_call.1} parent=19 // pred_check_branch
          %200 = sbr.rel (%p198) target = $region24
        $region23: #{tpu_custom_call.1} parent=19 // pred_region
          %p201 = scmp.lt.s32.totalorder %s27, 1
          %s202 = scalar_select %p201, %s27, 1
          %s203 = smul.addr %s202, 8
          %s204 = scalar_lea.vmem %s2, %s203
        $region24: #{tpu_custom_call.1} parent=19 // pred_fallthru
          _
        // Predicated region
        $region25: #{tpu_custom_call.1} parent=19 // pred_check
          %p205 = pneg %p103
        $region26: #{tpu_custom_call.1} parent=19 // pred_check_branch
          %207 = sbr.rel (%p205) target = $region28
        $region27: #{tpu_custom_call.1} parent=19 // pred_region
          %s208 = sand.u32 %s93, 1
          %s209 = scalar_lea.sflag [#allocation8], %s208
          %s210 = sand.u32 %s93, 1
          %s211 = smul.addr %s210, 8
          %s212 = scalar_lea.vmem [#allocation7], %s211
          %s214 = ssub.s32 128, 128
          %215 = vsyncadd %s209, %s214
          %s216 = smul.addr %s27, 128
          %s217 = scalar_lea.hbm %s3, %s216
          %s219 = sshll.u32 %s212, 4
          %s220 = int_to_ptr.vmem [resolvable:$true] %s219
          %222 = dma.hbm_to_vmem [thread:$0]  %s217, 128, %s220, %s209
        $region28: #{tpu_custom_call.1} parent=19 // pred_fallthru
          _
        // Predicated region
        $region29: #{tpu_custom_call.1} parent=19 // pred_check
          %p223 = pneg %p129
        $region30: #{tpu_custom_call.1} parent=19 // pred_check_branch
          %225 = sbr.rel (%p223) target = $region32
        $region31: #{tpu_custom_call.1} parent=19 // pred_region
          %p226 = scmp.lt.s32.totalorder %s27, 1
          %s227 = scalar_select %p226, %s27, 1
          %s228 = smul.addr %s227, 8
          %s229 = scalar_lea.vmem %s4, %s228
        $region32: #{tpu_custom_call.1} parent=19 // pred_fallthru
          _
      $region20: #{tpu_custom_call.1} parent=5 // pred_fallthru
        _
      %p230 = scmp.le.s32.totalorder 1, %s19
      %p231 = scmp.lt.s32.totalorder %s19, 3
      %p232 = pnand %p230, %p231
      %p233 = pneg %p232
      // Predicated region
      $region33: #{tpu_custom_call.1} parent=5 // pred_check
        _
      $region34: #{tpu_custom_call.1} parent=5 // pred_check_branch
        %235 = sbr.rel (%p232) target = $region36
      $region35: #{tpu_custom_call.1} parent=5 // pred_region
        %s236 = ssub.s32 %s19, 1
        // Predicated region
        $region37: #{tpu_custom_call.1} parent=35 // pred_check
          %p237 = pneg %p57
        $region38: #{tpu_custom_call.1} parent=35 // pred_check_branch
          %239 = sbr.rel (%p237) target = $region40
        $region39: #{tpu_custom_call.1} parent=35 // pred_region
          %240 = dma.done [#allocation5], 4096
        $region40: #{tpu_custom_call.1} parent=35 // pred_fallthru
          _
        %s241 = sand.u32 %s96, 1
        %s242 = scalar_lea.sflag [#allocation8], %s241
        %s243 = sand.u32 %s96, 1
        %s244 = smul.addr %s243, 8
        %s245 = scalar_lea.vmem [#allocation7], %s244
        // Predicated region
        $region41: #{tpu_custom_call.1} parent=35 // pred_check
          %p246 = pneg %p109
        $region42: #{tpu_custom_call.1} parent=35 // pred_check_branch
          %248 = sbr.rel (%p246) target = $region44
        $region43: #{tpu_custom_call.1} parent=35 // pred_region
          %249 = dma.done %s242, 128
        $region44: #{tpu_custom_call.1} parent=35 // pred_fallthru
          _
        %p250 = pneg %p57
        %p251 = pneg %p54
        %p252 = scmp.lt.s32.totalorder %s29, 1
        %s253 = scalar_select %p252, %s29, 1
        %s254 = smul.addr %s253, 8
        %s255 = scalar_lea.vmem %s2, %s254
        %p256 = pneg %p83
        %p257 = pneg %p80
        %s258 = sand.u32 %s96, 1
        %s259 = scalar_lea.sflag [#allocation8], %s258
        %s260 = sand.u32 %s96, 1
        %s261 = smul.addr %s260, 8
        %s262 = scalar_lea.vmem [#allocation7], %s261
        %p263 = pneg %p109
        %p264 = pneg %p106
        %p265 = scmp.lt.s32.totalorder %s29, 1
        %s266 = scalar_select %p265, %s29, 1
        %s267 = smul.addr %s266, 8
        %s268 = scalar_lea.vmem %s4, %s267
        %p269 = pneg %p135
        %p270 = pneg %p132
        %p271 = pneg %p163
        %p272 = pneg %p160
        %s273 = sand.u32 %s150, 1
        %s274 = scalar_lea.sflag [#allocation6], %s273
        %s275 = sand.u32 %s150, 1
        %s276 = smul.addr %s275, 16
        %s277 = scalar_lea.vmem [#allocation9], %s276
        %s278 = smul.u32 32, %s28
        %p279 = scmp.lt.s32.totalorder %s29, 1
        %s280 = scalar_select %p279, %s29, 1
        %s281 = smul.addr %s280, 8
        %s282 = scalar_lea.vmem %s2, %s281
        %p283 = scmp.lt.s32.totalorder %s29, 1
        %s284 = scalar_select %p283, %s29, 1
        %s285 = smul.addr %s284, 8
        %s286 = scalar_lea.vmem %s4, %s285
        %s287 = smul.u32 2, %s28
        %v288 = vld [vmem:[#allocation4] sm:$0xff]
        %v289 = vld [vmem:[#allocation4 + $0x8] sm:$0xff]
        %v290 = vld [vmem:[#allocation4 + $0x10] sm:$0xff]
        %v291 = vld [vmem:[#allocation4 + $0x18] sm:$0xff]
        %v292 = vld [vmem:[#allocation4 + $0x20] sm:$0xff]
        %v293 = vld [vmem:[#allocation4 + $0x28] sm:$0xff]
        %v294 = vld [vmem:[#allocation4 + $0x30] sm:$0xff]
        %v295 = vld [vmem:[#allocation4 + $0x38] sm:$0xff]
        %v296 = vld [vmem:[#allocation4 + $0x40] sm:$0xff]
        %v297 = vld [vmem:[#allocation4 + $0x48] sm:$0xff]
        %v298 = vld [vmem:[#allocation4 + $0x50] sm:$0xff]
        %v299 = vld [vmem:[#allocation4 + $0x58] sm:$0xff]
        %v300 = vld [vmem:[#allocation4 + $0x60] sm:$0xff]
        %v301 = vld [vmem:[#allocation4 + $0x68] sm:$0xff]
        %v302 = vld [vmem:[#allocation4 + $0x70] sm:$0xff]
        %v303 = vld [vmem:[#allocation4 + $0x78] sm:$0xff]
        %v304 = vld [vmem:[#allocation4 + $0x80] sm:$0xff]
        %v305 = vld [vmem:[#allocation4 + $0x88] sm:$0xff]
        %v306 = vld [vmem:[#allocation4 + $0x90] sm:$0xff]
        %v307 = vld [vmem:[#allocation4 + $0x98] sm:$0xff]
        %v308 = vld [vmem:[#allocation4 + $0xa0] sm:$0xff]
        %v309 = vld [vmem:[#allocation4 + $0xa8] sm:$0xff]
        %v310 = vld [vmem:[#allocation4 + $0xb0] sm:$0xff]
        %v311 = vld [vmem:[#allocation4 + $0xb8] sm:$0xff]
        %v312 = vld [vmem:[#allocation4 + $0xc0] sm:$0xff]
        %v313 = vld [vmem:[#allocation4 + $0xc8] sm:$0xff]
        %v314 = vld [vmem:[#allocation4 + $0xd0] sm:$0xff]
        %v315 = vld [vmem:[#allocation4 + $0xd8] sm:$0xff]
        %v316 = vld [vmem:[#allocation4 + $0xe0] sm:$0xff]
        %v317 = vld [vmem:[#allocation4 + $0xe8] sm:$0xff]
        %v318 = vld [vmem:[#allocation4 + $0xf0] sm:$0xff]
        %v319 = vld [vmem:[#allocation4 + $0xf8] sm:$0xff]
        %v320 = vld [vmem:[%s282] sm:$0xff]
        %v321 = vld [vmem:[%s245] sm:$0xff]
        %v322 = vld [vmem:[%s286] sm:$0xff]
        %v323 = vlaneseq
        %v324 = vshrl.u32 %v323, 7
        %v325 = vsub.s32 0, %v324
        %v326 = vrot.slane %v320, %v325
        %v327 = vmul.f32 %v288, %v326
        %v328 = vmul.f32 %v289, %v326
        %v329 = vmul.f32 %v290, %v326
        %v330 = vmul.f32 %v291, %v326
        %v331 = vmul.f32 %v292, %v326
        %v332 = vmul.f32 %v293, %v326
        %v333 = vmul.f32 %v294, %v326
        %v334 = vmul.f32 %v295, %v326
        %v335 = vmul.f32 %v296, %v326
        %v336 = vmul.f32 %v297, %v326
        %v337 = vmul.f32 %v298, %v326
        %v338 = vmul.f32 %v299, %v326
        %v339 = vmul.f32 %v300, %v326
        %v340 = vmul.f32 %v301, %v326
        %v341 = vmul.f32 %v302, %v326
        %v342 = vmul.f32 %v303, %v326
        %v343 = vmul.f32 %v304, %v326
        %v344 = vmul.f32 %v305, %v326
        %v345 = vmul.f32 %v306, %v326
        %v346 = vmul.f32 %v307, %v326
        %v347 = vmul.f32 %v308, %v326
        %v348 = vmul.f32 %v309, %v326
        %v349 = vmul.f32 %v310, %v326
        %v350 = vmul.f32 %v311, %v326
        %v351 = vmul.f32 %v312, %v326
        %v352 = vmul.f32 %v313, %v326
        %v353 = vmul.f32 %v314, %v326
        %v354 = vmul.f32 %v315, %v326
        %v355 = vmul.f32 %v316, %v326
        %v356 = vmul.f32 %v317, %v326
        %v357 = vmul.f32 %v318, %v326
        %v358 = vmul.f32 %v319, %v326
        %v359 = vmax.f32 %v327, 0.0
        %v360 = vmax.f32 %v328, 0.0
        %v361 = vmax.f32 %v329, 0.0
        %v362 = vmax.f32 %v330, 0.0
        %v363 = vmax.f32 %v331, 0.0
        %v364 = vmax.f32 %v332, 0.0
        %v365 = vmax.f32 %v333, 0.0
        %v366 = vmax.f32 %v334, 0.0
        %v367 = vmax.f32 %v335, 0.0
        %v368 = vmax.f32 %v336, 0.0
        %v369 = vmax.f32 %v337, 0.0
        %v370 = vmax.f32 %v338, 0.0
        %v371 = vmax.f32 %v339, 0.0
        %v372 = vmax.f32 %v340, 0.0
        %v373 = vmax.f32 %v341, 0.0
        %v374 = vmax.f32 %v342, 0.0
        %v375 = vmax.f32 %v343, 0.0
        %v376 = vmax.f32 %v344, 0.0
        %v377 = vmax.f32 %v345, 0.0
        %v378 = vmax.f32 %v346, 0.0
        %v379 = vmax.f32 %v347, 0.0
        %v380 = vmax.f32 %v348, 0.0
        %v381 = vmax.f32 %v349, 0.0
        %v382 = vmax.f32 %v350, 0.0
        %v383 = vmax.f32 %v351, 0.0
        %v384 = vmax.f32 %v352, 0.0
        %v385 = vmax.f32 %v353, 0.0
        %v386 = vmax.f32 %v354, 0.0
        %v387 = vmax.f32 %v355, 0.0
        %v388 = vmax.f32 %v356, 0.0
        %v389 = vmax.f32 %v357, 0.0
        %v390 = vmax.f32 %v358, 0.0
        %v392 = vrot.slane %v321, 7
        %vm393 = vcmask 1041409
        %v394 = vsel %vm393, %v392, %v321
        %v395 = vrot.slane %v321, 6
        %vm396 = vcmask 1042434
        %v397 = vsel %vm396, %v395, %v394
        %v398 = vrot.slane %v321, 5
        %vm399 = vcmask 1043459
        %v400 = vsel %vm399, %v398, %v397
        %v401 = vrot.slane %v321, 4
        %vm402 = vcmask 1044484
        %v403 = vsel %vm402, %v401, %v400
        %v404 = vrot.slane %v321, 3
        %vm405 = vcmask 1045509
        %v406 = vsel %vm405, %v404, %v403
        %v407 = vrot.slane %v321, 2
        %vm408 = vcmask 1046534
        %v409 = vsel %vm408, %v407, %v406
        %v410 = vrot.slane %v321, 1
        %vm411 = vcmask 1047559
        %v412 = vsel %vm411, %v410, %v409
        %v414 = vmul.f32 %v359, %v412
        %v415 = vmul.f32 %v360, %v412
        %v416 = vmul.f32 %v361, %v412
        %v417 = vmul.f32 %v362, %v412
        %v418 = vmul.f32 %v363, %v412
        %v419 = vmul.f32 %v364, %v412
        %v420 = vmul.f32 %v365, %v412
        %v421 = vmul.f32 %v366, %v412
        %v422 = vmul.f32 %v367, %v412
        %v423 = vmul.f32 %v368, %v412
        %v424 = vmul.f32 %v369, %v412
        %v425 = vmul.f32 %v370, %v412
        %v426 = vmul.f32 %v371, %v412
        %v427 = vmul.f32 %v372, %v412
        %v428 = vmul.f32 %v373, %v412
        %v429 = vmul.f32 %v374, %v412
        %v430 = vmul.f32 %v375, %v412
        %v431 = vmul.f32 %v376, %v412
        %v432 = vmul.f32 %v377, %v412
        %v433 = vmul.f32 %v378, %v412
        %v434 = vmul.f32 %v379, %v412
        %v435 = vmul.f32 %v380, %v412
        %v436 = vmul.f32 %v381, %v412
        %v437 = vmul.f32 %v382, %v412
        %v438 = vmul.f32 %v383, %v412
        %v439 = vmul.f32 %v384, %v412
        %v440 = vmul.f32 %v385, %v412
        %v441 = vmul.f32 %v386, %v412
        %v442 = vmul.f32 %v387, %v412
        %v443 = vmul.f32 %v388, %v412
        %v444 = vmul.f32 %v389, %v412
        %v445 = vmul.f32 %v390, %v412
        %446 = vadd.xlane.f32.xlu0 %v414
        %v447 = vpop.xlane.xlu0 %446
        %448 = vadd.xlane.f32.xlu0 %v415
        %v449 = vpop.xlane.xlu0 %448
        %450 = vadd.xlane.f32.xlu0 %v416
        %v451 = vpop.xlane.xlu0 %450
        %452 = vadd.xlane.f32.xlu0 %v417
        %v453 = vpop.xlane.xlu0 %452
        %454 = vadd.xlane.f32.xlu0 %v418
        %v455 = vpop.xlane.xlu0 %454
        %456 = vadd.xlane.f32.xlu0 %v419
        %v457 = vpop.xlane.xlu0 %456
        %458 = vadd.xlane.f32.xlu0 %v420
        %v459 = vpop.xlane.xlu0 %458
        %460 = vadd.xlane.f32.xlu0 %v421
        %v461 = vpop.xlane.xlu0 %460
        %462 = vadd.xlane.f32.xlu0 %v422
        %v463 = vpop.xlane.xlu0 %462
        %464 = vadd.xlane.f32.xlu0 %v423
        %v465 = vpop.xlane.xlu0 %464
        %466 = vadd.xlane.f32.xlu0 %v424
        %v467 = vpop.xlane.xlu0 %466
        %468 = vadd.xlane.f32.xlu0 %v425
        %v469 = vpop.xlane.xlu0 %468
        %470 = vadd.xlane.f32.xlu0 %v426
        %v471 = vpop.xlane.xlu0 %470
        %472 = vadd.xlane.f32.xlu0 %v427
        %v473 = vpop.xlane.xlu0 %472
        %474 = vadd.xlane.f32.xlu0 %v428
        %v475 = vpop.xlane.xlu0 %474
        %476 = vadd.xlane.f32.xlu0 %v429
        %v477 = vpop.xlane.xlu0 %476
        %478 = vadd.xlane.f32.xlu0 %v430
        %v479 = vpop.xlane.xlu0 %478
        %480 = vadd.xlane.f32.xlu0 %v431
        %v481 = vpop.xlane.xlu0 %480
        %482 = vadd.xlane.f32.xlu0 %v432
        %v483 = vpop.xlane.xlu0 %482
        %484 = vadd.xlane.f32.xlu0 %v433
        %v485 = vpop.xlane.xlu0 %484
        %486 = vadd.xlane.f32.xlu0 %v434
        %v487 = vpop.xlane.xlu0 %486
        %488 = vadd.xlane.f32.xlu0 %v435
        %v489 = vpop.xlane.xlu0 %488
        %490 = vadd.xlane.f32.xlu0 %v436
        %v491 = vpop.xlane.xlu0 %490
        %492 = vadd.xlane.f32.xlu0 %v437
        %v493 = vpop.xlane.xlu0 %492
        %494 = vadd.xlane.f32.xlu0 %v438
        %v495 = vpop.xlane.xlu0 %494
        %496 = vadd.xlane.f32.xlu0 %v439
        %v497 = vpop.xlane.xlu0 %496
        %498 = vadd.xlane.f32.xlu0 %v440
        %v499 = vpop.xlane.xlu0 %498
        %500 = vadd.xlane.f32.xlu0 %v441
        %v501 = vpop.xlane.xlu0 %500
        %502 = vadd.xlane.f32.xlu0 %v442
        %v503 = vpop.xlane.xlu0 %502
        %504 = vadd.xlane.f32.xlu0 %v443
        %v505 = vpop.xlane.xlu0 %504
        %506 = vadd.xlane.f32.xlu0 %v444
        %v507 = vpop.xlane.xlu0 %506
        %508 = vadd.xlane.f32.xlu0 %v445
        %v509 = vpop.xlane.xlu0 %508
        %510 = vxpose.xlu0.b32.start [1/16] %v447, 128
        %511 = vxpose.xlu0.b32.cont [2/16] %v449, 128
        %512 = vxpose.xlu0.b32.cont [3/16] %v451, 128
        %513 = vxpose.xlu0.b32.cont [4/16] %v453, 128
        %514 = vxpose.xlu0.b32.cont [5/16] %v455, 128
        %515 = vxpose.xlu0.b32.cont [6/16] %v457, 128
        %516 = vxpose.xlu0.b32.cont [7/16] %v459, 128
        %517 = vxpose.xlu0.b32.cont [8/16] %v461, 128
        %518 = vxpose.xlu0.b32.cont [9/16] %v463, 128
        %519 = vxpose.xlu0.b32.cont [10/16] %v465, 128
        %520 = vxpose.xlu0.b32.cont [11/16] %v467, 128
        %521 = vxpose.xlu0.b32.cont [12/16] %v469, 128
        %522 = vxpose.xlu0.b32.cont [13/16] %v471, 128
        %523 = vxpose.xlu0.b32.cont [14/16] %v473, 128
        %524 = vxpose.xlu0.b32.cont [15/16] %v475, 128
        %525 = vxpose.xlu0.b32.end [16/16] %v477, 128
        %v526 = vpop.trf.xlu0
        %v527 = vpop.trf.xlu0
        %v528 = vpop.trf.xlu0
        %v529 = vpop.trf.xlu0
        %v530 = vpop.trf.xlu0
        %v531 = vpop.trf.xlu0
        %v532 = vpop.trf.xlu0
        %v533 = vpop.trf.xlu0
        %v534 = vpop.trf.xlu0
        %v535 = vpop.trf.xlu0
        %v536 = vpop.trf.xlu0
        %v537 = vpop.trf.xlu0
        %v538 = vpop.trf.xlu0
        %v539 = vpop.trf.xlu0
        %v540 = vpop.trf.xlu0
        %v541 = vpop.trf.xlu0
        %542 = vxpose.xlu0.b32.start [1/16] %v479, 128
        %543 = vxpose.xlu0.b32.cont [2/16] %v481, 128
        %544 = vxpose.xlu0.b32.cont [3/16] %v483, 128
        %545 = vxpose.xlu0.b32.cont [4/16] %v485, 128
        %546 = vxpose.xlu0.b32.cont [5/16] %v487, 128
        %547 = vxpose.xlu0.b32.cont [6/16] %v489, 128
        %548 = vxpose.xlu0.b32.cont [7/16] %v491, 128
        %549 = vxpose.xlu0.b32.cont [8/16] %v493, 128
        %550 = vxpose.xlu0.b32.cont [9/16] %v495, 128
        %551 = vxpose.xlu0.b32.cont [10/16] %v497, 128
        %552 = vxpose.xlu0.b32.cont [11/16] %v499, 128
        %553 = vxpose.xlu0.b32.cont [12/16] %v501, 128
        %554 = vxpose.xlu0.b32.cont [13/16] %v503, 128
        %555 = vxpose.xlu0.b32.cont [14/16] %v505, 128
        %556 = vxpose.xlu0.b32.cont [15/16] %v507, 128
        %557 = vxpose.xlu0.b32.end [16/16] %v509, 128
        %v558 = vpop.trf.xlu0
        %v559 = vpop.trf.xlu0
        %v560 = vpop.trf.xlu0
        %v561 = vpop.trf.xlu0
        %v562 = vpop.trf.xlu0
        %v563 = vpop.trf.xlu0
        %v564 = vpop.trf.xlu0
        %v565 = vpop.trf.xlu0
        %v566 = vpop.trf.xlu0
        %v567 = vpop.trf.xlu0
        %v568 = vpop.trf.xlu0
        %v569 = vpop.trf.xlu0
        %v570 = vpop.trf.xlu0
        %v571 = vpop.trf.xlu0
        %v572 = vpop.trf.xlu0
        %v573 = vpop.trf.xlu0
        %575 = vset.pattern.permute.xlu0 0
        %576 = vperm.xlu0 %575, %v322
        %v577 = vpop.permute.xlu0 %576
        %v579 = vadd.f32 %v526, %v577
        %v580 = vadd.f32 %v558, %v577
        %v583 = vcombine.low %v579, %v580
        %v585 = vunpack.c.l.s4 1966171168
        %v586 = vunpack.c.0.s8 %v585
        %v587 = vlaneseq
        %v588 = vshrl.u32 %v587, 7
        %v589 = vsub.s32 %v586, %v588
        %v590 = vrot.slane %v583, %v589
        %v592 = vunpack.c.l.s4 1966171168
        %v593 = vunpack.c.0.s8 %v592
        %v594 = vlaneseq
        %v595 = vshrl.u32 %v594, 7
        %v596 = vsub.s32 %v593, %v595
        %v597 = vrot.slane %v590, %v596
        %v599 = vlaneseq
        %vm600 = vcmp.ge.s32.totalorder %v599, 0
        %vm601 = vcmp.lt.s32.totalorder %v599, 256
        %vm602 = vmand %vm600, %vm601
        %603 = vst.msk [vmem:[%s277] ss:$8 sm:$0x3] %vm602, %v597
        %604 = vst.msk [vmem:[%s277] ss:$8 sm:$0x0] %vm602, %v597
        %v605 = vlaneseq
        %v606 = vshrl.u32 %v605, 7
        %v607 = vsub.s32 1, %v606
        %v608 = vrot.slane %v320, %v607
        %v609 = vmul.f32 %v288, %v608
        %v610 = vmul.f32 %v289, %v608
        %v611 = vmul.f32 %v290, %v608
        %v612 = vmul.f32 %v291, %v608
        %v613 = vmul.f32 %v292, %v608
        %v614 = vmul.f32 %v293, %v608
        %v615 = vmul.f32 %v294, %v608
        %v616 = vmul.f32 %v295, %v608
        %v617 = vmul.f32 %v296, %v608
        %v618 = vmul.f32 %v297, %v608
        %v619 = vmul.f32 %v298, %v608
        %v620 = vmul.f32 %v299, %v608
        %v621 = vmul.f32 %v300, %v608
        %v622 = vmul.f32 %v301, %v608
        %v623 = vmul.f32 %v302, %v608
        %v624 = vmul.f32 %v303, %v608
        %v625 = vmul.f32 %v304, %v608
        %v626 = vmul.f32 %v305, %v608
        %v627 = vmul.f32 %v306, %v608
        %v628 = vmul.f32 %v307, %v608
        %v629 = vmul.f32 %v308, %v608
        %v630 = vmul.f32 %v309, %v608
        %v631 = vmul.f32 %v310, %v608
        %v632 = vmul.f32 %v311, %v608
        %v633 = vmul.f32 %v312, %v608
        %v634 = vmul.f32 %v313, %v608
        %v635 = vmul.f32 %v314, %v608
        %v636 = vmul.f32 %v315, %v608
        %v637 = vmul.f32 %v316, %v608
        %v638 = vmul.f32 %v317, %v608
        %v639 = vmul.f32 %v318, %v608
        %v640 = vmul.f32 %v319, %v608
        %v641 = vmax.f32 %v609, 0.0
        %v642 = vmax.f32 %v610, 0.0
        %v643 = vmax.f32 %v611, 0.0
        %v644 = vmax.f32 %v612, 0.0
        %v645 = vmax.f32 %v613, 0.0
        %v646 = vmax.f32 %v614, 0.0
        %v647 = vmax.f32 %v615, 0.0
        %v648 = vmax.f32 %v616, 0.0
        %v649 = vmax.f32 %v617, 0.0
        %v650 = vmax.f32 %v618, 0.0
        %v651 = vmax.f32 %v619, 0.0
        %v652 = vmax.f32 %v620, 0.0
        %v653 = vmax.f32 %v621, 0.0
        %v654 = vmax.f32 %v622, 0.0
        %v655 = vmax.f32 %v623, 0.0
        %v656 = vmax.f32 %v624, 0.0
        %v657 = vmax.f32 %v625, 0.0
        %v658 = vmax.f32 %v626, 0.0
        %v659 = vmax.f32 %v627, 0.0
        %v660 = vmax.f32 %v628, 0.0
        %v661 = vmax.f32 %v629, 0.0
        %v662 = vmax.f32 %v630, 0.0
        %v663 = vmax.f32 %v631, 0.0
        %v664 = vmax.f32 %v632, 0.0
        %v665 = vmax.f32 %v633, 0.0
        %v666 = vmax.f32 %v634, 0.0
        %v667 = vmax.f32 %v635, 0.0
        %v668 = vmax.f32 %v636, 0.0
        %v669 = vmax.f32 %v637, 0.0
        %v670 = vmax.f32 %v638, 0.0
        %v671 = vmax.f32 %v639, 0.0
        %v672 = vmax.f32 %v640, 0.0
        %v673 = vsel %vm393, %v321, %v410
        %v674 = vsel %vm396, %v392, %v673
        %v675 = vsel %vm399, %v395, %v674
        %v676 = vsel %vm402, %v398, %v675
        %v677 = vsel %vm405, %v401, %v676
        %v678 = vsel %vm408, %v404, %v677
        %v679 = vsel %vm411, %v407, %v678
        %v681 = vmul.f32 %v641, %v679
        %v682 = vmul.f32 %v642, %v679
        %v683 = vmul.f32 %v643, %v679
        %v684 = vmul.f32 %v644, %v679
        %v685 = vmul.f32 %v645, %v679
        %v686 = vmul.f32 %v646, %v679
        %v687 = vmul.f32 %v647, %v679
        %v688 = vmul.f32 %v648, %v679
        %v689 = vmul.f32 %v649, %v679
        %v690 = vmul.f32 %v650, %v679
        %v691 = vmul.f32 %v651, %v679
        %v692 = vmul.f32 %v652, %v679
        %v693 = vmul.f32 %v653, %v679
        %v694 = vmul.f32 %v654, %v679
        %v695 = vmul.f32 %v655, %v679
        %v696 = vmul.f32 %v656, %v679
        %v697 = vmul.f32 %v657, %v679
        %v698 = vmul.f32 %v658, %v679
        %v699 = vmul.f32 %v659, %v679
        %v700 = vmul.f32 %v660, %v679
        %v701 = vmul.f32 %v661, %v679
        %v702 = vmul.f32 %v662, %v679
        %v703 = vmul.f32 %v663, %v679
        %v704 = vmul.f32 %v664, %v679
        %v705 = vmul.f32 %v665, %v679
        %v706 = vmul.f32 %v666, %v679
        %v707 = vmul.f32 %v667, %v679
        %v708 = vmul.f32 %v668, %v679
        %v709 = vmul.f32 %v669, %v679
        %v710 = vmul.f32 %v670, %v679
        %v711 = vmul.f32 %v671, %v679
        %v712 = vmul.f32 %v672, %v679
        %713 = vadd.xlane.f32.xlu0 %v681
        %v714 = vpop.xlane.xlu0 %713
        %715 = vadd.xlane.f32.xlu0 %v682
        %v716 = vpop.xlane.xlu0 %715
        %717 = vadd.xlane.f32.xlu0 %v683
        %v718 = vpop.xlane.xlu0 %717
        %719 = vadd.xlane.f32.xlu0 %v684
        %v720 = vpop.xlane.xlu0 %719
        %721 = vadd.xlane.f32.xlu0 %v685
        %v722 = vpop.xlane.xlu0 %721
        %723 = vadd.xlane.f32.xlu0 %v686
        %v724 = vpop.xlane.xlu0 %723
        %725 = vadd.xlane.f32.xlu0 %v687
        %v726 = vpop.xlane.xlu0 %725
        %727 = vadd.xlane.f32.xlu0 %v688
        %v728 = vpop.xlane.xlu0 %727
        %729 = vadd.xlane.f32.xlu0 %v689
        %v730 = vpop.xlane.xlu0 %729
        %731 = vadd.xlane.f32.xlu0 %v690
        %v732 = vpop.xlane.xlu0 %731
        %733 = vadd.xlane.f32.xlu0 %v691
        %v734 = vpop.xlane.xlu0 %733
        %735 = vadd.xlane.f32.xlu0 %v692
        %v736 = vpop.xlane.xlu0 %735
        %737 = vadd.xlane.f32.xlu0 %v693
        %v738 = vpop.xlane.xlu0 %737
        %739 = vadd.xlane.f32.xlu0 %v694
        %v740 = vpop.xlane.xlu0 %739
        %741 = vadd.xlane.f32.xlu0 %v695
        %v742 = vpop.xlane.xlu0 %741
        %743 = vadd.xlane.f32.xlu0 %v696
        %v744 = vpop.xlane.xlu0 %743
        %745 = vadd.xlane.f32.xlu0 %v697
        %v746 = vpop.xlane.xlu0 %745
        %747 = vadd.xlane.f32.xlu0 %v698
        %v748 = vpop.xlane.xlu0 %747
        %749 = vadd.xlane.f32.xlu0 %v699
        %v750 = vpop.xlane.xlu0 %749
        %751 = vadd.xlane.f32.xlu0 %v700
        %v752 = vpop.xlane.xlu0 %751
        %753 = vadd.xlane.f32.xlu0 %v701
        %v754 = vpop.xlane.xlu0 %753
        %755 = vadd.xlane.f32.xlu0 %v702
        %v756 = vpop.xlane.xlu0 %755
        %757 = vadd.xlane.f32.xlu0 %v703
        %v758 = vpop.xlane.xlu0 %757
        %759 = vadd.xlane.f32.xlu0 %v704
        %v760 = vpop.xlane.xlu0 %759
        %761 = vadd.xlane.f32.xlu0 %v705
        %v762 = vpop.xlane.xlu0 %761
        %763 = vadd.xlane.f32.xlu0 %v706
        %v764 = vpop.xlane.xlu0 %763
        %765 = vadd.xlane.f32.xlu0 %v707
        %v766 = vpop.xlane.xlu0 %765
        %767 = vadd.xlane.f32.xlu0 %v708
        %v768 = vpop.xlane.xlu0 %767
        %769 = vadd.xlane.f32.xlu0 %v709
        %v770 = vpop.xlane.xlu0 %769
        %771 = vadd.xlane.f32.xlu0 %v710
        %v772 = vpop.xlane.xlu0 %771
        %773 = vadd.xlane.f32.xlu0 %v711
        %v774 = vpop.xlane.xlu0 %773
        %775 = vadd.xlane.f32.xlu0 %v712
        %v776 = vpop.xlane.xlu0 %775
        %777 = vxpose.xlu0.b32.start [1/16] %v714, 128
        %778 = vxpose.xlu0.b32.cont [2/16] %v716, 128
        %779 = vxpose.xlu0.b32.cont [3/16] %v718, 128
        %780 = vxpose.xlu0.b32.cont [4/16] %v720, 128
        %781 = vxpose.xlu0.b32.cont [5/16] %v722, 128
        %782 = vxpose.xlu0.b32.cont [6/16] %v724, 128
        %783 = vxpose.xlu0.b32.cont [7/16] %v726, 128
        %784 = vxpose.xlu0.b32.cont [8/16] %v728, 128
        %785 = vxpose.xlu0.b32.cont [9/16] %v730, 128
        %786 = vxpose.xlu0.b32.cont [10/16] %v732, 128
        %787 = vxpose.xlu0.b32.cont [11/16] %v734, 128
        %788 = vxpose.xlu0.b32.cont [12/16] %v736, 128
        %789 = vxpose.xlu0.b32.cont [13/16] %v738, 128
        %790 = vxpose.xlu0.b32.cont [14/16] %v740, 128
        %791 = vxpose.xlu0.b32.cont [15/16] %v742, 128
        %792 = vxpose.xlu0.b32.end [16/16] %v744, 128
        %v793 = vpop.trf.xlu0
        %v794 = vpop.trf.xlu0
        %v795 = vpop.trf.xlu0
        %v796 = vpop.trf.xlu0
        %v797 = vpop.trf.xlu0
        %v798 = vpop.trf.xlu0
        %v799 = vpop.trf.xlu0
        %v800 = vpop.trf.xlu0
        %v801 = vpop.trf.xlu0
        %v802 = vpop.trf.xlu0
        %v803 = vpop.trf.xlu0
        %v804 = vpop.trf.xlu0
        %v805 = vpop.trf.xlu0
        %v806 = vpop.trf.xlu0
        %v807 = vpop.trf.xlu0
        %v808 = vpop.trf.xlu0
        %809 = vxpose.xlu0.b32.start [1/16] %v746, 128
        %810 = vxpose.xlu0.b32.cont [2/16] %v748, 128
        %811 = vxpose.xlu0.b32.cont [3/16] %v750, 128
        %812 = vxpose.xlu0.b32.cont [4/16] %v752, 128
        %813 = vxpose.xlu0.b32.cont [5/16] %v754, 128
        %814 = vxpose.xlu0.b32.cont [6/16] %v756, 128
        %815 = vxpose.xlu0.b32.cont [7/16] %v758, 128
        %816 = vxpose.xlu0.b32.cont [8/16] %v760, 128
        %817 = vxpose.xlu0.b32.cont [9/16] %v762, 128
        %818 = vxpose.xlu0.b32.cont [10/16] %v764, 128
        %819 = vxpose.xlu0.b32.cont [11/16] %v766, 128
        %820 = vxpose.xlu0.b32.cont [12/16] %v768, 128
        %821 = vxpose.xlu0.b32.cont [13/16] %v770, 128
        %822 = vxpose.xlu0.b32.cont [14/16] %v772, 128
        %823 = vxpose.xlu0.b32.cont [15/16] %v774, 128
        %824 = vxpose.xlu0.b32.end [16/16] %v776, 128
        %v825 = vpop.trf.xlu0
        %v826 = vpop.trf.xlu0
        %v827 = vpop.trf.xlu0
        %v828 = vpop.trf.xlu0
        %v829 = vpop.trf.xlu0
        %v830 = vpop.trf.xlu0
        %v831 = vpop.trf.xlu0
        %v832 = vpop.trf.xlu0
        %v833 = vpop.trf.xlu0
        %v834 = vpop.trf.xlu0
        %v835 = vpop.trf.xlu0
        %v836 = vpop.trf.xlu0
        %v837 = vpop.trf.xlu0
        %v838 = vpop.trf.xlu0
        %v839 = vpop.trf.xlu0
        %v840 = vpop.trf.xlu0
        %v841 = vrot.slane %v577, 1
        %v843 = vadd.f32 %v793, %v841
        %v844 = vadd.f32 %v825, %v841
        %v847 = vcombine.low %v843, %v844
        %v849 = vunpack.c.l.s4 1966171168
        %v850 = vunpack.c.0.s8 %v849
        %v851 = vlaneseq
        %v852 = vshrl.u32 %v851, 7
        %v853 = vsub.s32 %v850, %v852
        %v854 = vrot.slane %v847, %v853
        %v856 = vunpack.c.l.s4 1966171168
        %v857 = vunpack.c.0.s8 %v856
        %v858 = vlaneseq
        %v859 = vshrl.u32 %v858, 7
        %v860 = vsub.s32 %v857, %v859
        %v861 = vrot.slane %v854, %v860
        %s863 = scalar_lea.vmem %s277, 1 [#allocation9]
        %864 = vst.msk [vmem:[%s863] ss:$8 sm:$0x3] %vm602, %v861
        %865 = vst.msk [vmem:[%s863] ss:$8 sm:$0x0] %vm602, %v861
        %v866 = vlaneseq
        %v867 = vshrl.u32 %v866, 7
        %v868 = vsub.s32 2, %v867
        %v869 = vrot.slane %v320, %v868
        %v870 = vmul.f32 %v288, %v869
        %v871 = vmul.f32 %v289, %v869
        %v872 = vmul.f32 %v290, %v869
        %v873 = vmul.f32 %v291, %v869
        %v874 = vmul.f32 %v292, %v869
        %v875 = vmul.f32 %v293, %v869
        %v876 = vmul.f32 %v294, %v869
        %v877 = vmul.f32 %v295, %v869
        %v878 = vmul.f32 %v296, %v869
        %v879 = vmul.f32 %v297, %v869
        %v880 = vmul.f32 %v298, %v869
        %v881 = vmul.f32 %v299, %v869
        %v882 = vmul.f32 %v300, %v869
        %v883 = vmul.f32 %v301, %v869
        %v884 = vmul.f32 %v302, %v869
        %v885 = vmul.f32 %v303, %v869
        %v886 = vmul.f32 %v304, %v869
        %v887 = vmul.f32 %v305, %v869
        %v888 = vmul.f32 %v306, %v869
        %v889 = vmul.f32 %v307, %v869
        %v890 = vmul.f32 %v308, %v869
        %v891 = vmul.f32 %v309, %v869
        %v892 = vmul.f32 %v310, %v869
        %v893 = vmul.f32 %v311, %v869
        %v894 = vmul.f32 %v312, %v869
        %v895 = vmul.f32 %v313, %v869
        %v896 = vmul.f32 %v314, %v869
        %v897 = vmul.f32 %v315, %v869
        %v898 = vmul.f32 %v316, %v869
        %v899 = vmul.f32 %v317, %v869
        %v900 = vmul.f32 %v318, %v869
        %v901 = vmul.f32 %v319, %v869
        %v902 = vmax.f32 %v870, 0.0
        %v903 = vmax.f32 %v871, 0.0
        %v904 = vmax.f32 %v872, 0.0
        %v905 = vmax.f32 %v873, 0.0
        %v906 = vmax.f32 %v874, 0.0
        %v907 = vmax.f32 %v875, 0.0
        %v908 = vmax.f32 %v876, 0.0
        %v909 = vmax.f32 %v877, 0.0
        %v910 = vmax.f32 %v878, 0.0
        %v911 = vmax.f32 %v879, 0.0
        %v912 = vmax.f32 %v880, 0.0
        %v913 = vmax.f32 %v881, 0.0
        %v914 = vmax.f32 %v882, 0.0
        %v915 = vmax.f32 %v883, 0.0
        %v916 = vmax.f32 %v884, 0.0
        %v917 = vmax.f32 %v885, 0.0
        %v918 = vmax.f32 %v886, 0.0
        %v919 = vmax.f32 %v887, 0.0
        %v920 = vmax.f32 %v888, 0.0
        %v921 = vmax.f32 %v889, 0.0
        %v922 = vmax.f32 %v890, 0.0
        %v923 = vmax.f32 %v891, 0.0
        %v924 = vmax.f32 %v892, 0.0
        %v925 = vmax.f32 %v893, 0.0
        %v926 = vmax.f32 %v894, 0.0
        %v927 = vmax.f32 %v895, 0.0
        %v928 = vmax.f32 %v896, 0.0
        %v929 = vmax.f32 %v897, 0.0
        %v930 = vmax.f32 %v898, 0.0
        %v931 = vmax.f32 %v899, 0.0
        %v932 = vmax.f32 %v900, 0.0
        %v933 = vmax.f32 %v901, 0.0
        %v934 = vsel %vm393, %v410, %v407
        %v935 = vsel %vm396, %v321, %v934
        %v936 = vsel %vm399, %v392, %v935
        %v937 = vsel %vm402, %v395, %v936
        %v938 = vsel %vm405, %v398, %v937
        %v939 = vsel %vm408, %v401, %v938
        %v940 = vsel %vm411, %v404, %v939
        %v942 = vmul.f32 %v902, %v940
        %v943 = vmul.f32 %v903, %v940
        %v944 = vmul.f32 %v904, %v940
        %v945 = vmul.f32 %v905, %v940
        %v946 = vmul.f32 %v906, %v940
        %v947 = vmul.f32 %v907, %v940
        %v948 = vmul.f32 %v908, %v940
        %v949 = vmul.f32 %v909, %v940
        %v950 = vmul.f32 %v910, %v940
        %v951 = vmul.f32 %v911, %v940
        %v952 = vmul.f32 %v912, %v940
        %v953 = vmul.f32 %v913, %v940
        %v954 = vmul.f32 %v914, %v940
        %v955 = vmul.f32 %v915, %v940
        %v956 = vmul.f32 %v916, %v940
        %v957 = vmul.f32 %v917, %v940
        %v958 = vmul.f32 %v918, %v940
        %v959 = vmul.f32 %v919, %v940
        %v960 = vmul.f32 %v920, %v940
        %v961 = vmul.f32 %v921, %v940
        %v962 = vmul.f32 %v922, %v940
        %v963 = vmul.f32 %v923, %v940
        %v964 = vmul.f32 %v924, %v940
        %v965 = vmul.f32 %v925, %v940
        %v966 = vmul.f32 %v926, %v940
        %v967 = vmul.f32 %v927, %v940
        %v968 = vmul.f32 %v928, %v940
        %v969 = vmul.f32 %v929, %v940
        %v970 = vmul.f32 %v930, %v940
        %v971 = vmul.f32 %v931, %v940
        %v972 = vmul.f32 %v932, %v940
        %v973 = vmul.f32 %v933, %v940
        %974 = vadd.xlane.f32.xlu0 %v942
        %v975 = vpop.xlane.xlu0 %974
        %976 = vadd.xlane.f32.xlu0 %v943
        %v977 = vpop.xlane.xlu0 %976
        %978 = vadd.xlane.f32.xlu0 %v944
        %v979 = vpop.xlane.xlu0 %978
        %980 = vadd.xlane.f32.xlu0 %v945
        %v981 = vpop.xlane.xlu0 %980
        %982 = vadd.xlane.f32.xlu0 %v946
        %v983 = vpop.xlane.xlu0 %982
        %984 = vadd.xlane.f32.xlu0 %v947
        %v985 = vpop.xlane.xlu0 %984
        %986 = vadd.xlane.f32.xlu0 %v948
        %v987 = vpop.xlane.xlu0 %986
        %988 = vadd.xlane.f32.xlu0 %v949
        %v989 = vpop.xlane.xlu0 %988
        %990 = vadd.xlane.f32.xlu0 %v950
        %v991 = vpop.xlane.xlu0 %990
        %992 = vadd.xlane.f32.xlu0 %v951
        %v993 = vpop.xlane.xlu0 %992
        %994 = vadd.xlane.f32.xlu0 %v952
        %v995 = vpop.xlane.xlu0 %994
        %996 = vadd.xlane.f32.xlu0 %v953
        %v997 = vpop.xlane.xlu0 %996
        %998 = vadd.xlane.f32.xlu0 %v954
        %v999 = vpop.xlane.xlu0 %998
        %1000 = vadd.xlane.f32.xlu0 %v955
        %v1001 = vpop.xlane.xlu0 %1000
        %1002 = vadd.xlane.f32.xlu0 %v956
        %v1003 = vpop.xlane.xlu0 %1002
        %1004 = vadd.xlane.f32.xlu0 %v957
        %v1005 = vpop.xlane.xlu0 %1004
        %1006 = vadd.xlane.f32.xlu0 %v958
        %v1007 = vpop.xlane.xlu0 %1006
        %1008 = vadd.xlane.f32.xlu0 %v959
        %v1009 = vpop.xlane.xlu0 %1008
        %1010 = vadd.xlane.f32.xlu0 %v960
        %v1011 = vpop.xlane.xlu0 %1010
        %1012 = vadd.xlane.f32.xlu0 %v961
        %v1013 = vpop.xlane.xlu0 %1012
        %1014 = vadd.xlane.f32.xlu0 %v962
        %v1015 = vpop.xlane.xlu0 %1014
        %1016 = vadd.xlane.f32.xlu0 %v963
        %v1017 = vpop.xlane.xlu0 %1016
        %1018 = vadd.xlane.f32.xlu0 %v964
        %v1019 = vpop.xlane.xlu0 %1018
        %1020 = vadd.xlane.f32.xlu0 %v965
        %v1021 = vpop.xlane.xlu0 %1020
        %1022 = vadd.xlane.f32.xlu0 %v966
        %v1023 = vpop.xlane.xlu0 %1022
        %1024 = vadd.xlane.f32.xlu0 %v967
        %v1025 = vpop.xlane.xlu0 %1024
        %1026 = vadd.xlane.f32.xlu0 %v968
        %v1027 = vpop.xlane.xlu0 %1026
        %1028 = vadd.xlane.f32.xlu0 %v969
        %v1029 = vpop.xlane.xlu0 %1028
        %1030 = vadd.xlane.f32.xlu0 %v970
        %v1031 = vpop.xlane.xlu0 %1030
        %1032 = vadd.xlane.f32.xlu0 %v971
        %v1033 = vpop.xlane.xlu0 %1032
        %1034 = vadd.xlane.f32.xlu0 %v972
        %v1035 = vpop.xlane.xlu0 %1034
        %1036 = vadd.xlane.f32.xlu0 %v973
        %v1037 = vpop.xlane.xlu0 %1036
        %1038 = vxpose.xlu0.b32.start [1/16] %v975, 128
        %1039 = vxpose.xlu0.b32.cont [2/16] %v977, 128
        %1040 = vxpose.xlu0.b32.cont [3/16] %v979, 128
        %1041 = vxpose.xlu0.b32.cont [4/16] %v981, 128
        %1042 = vxpose.xlu0.b32.cont [5/16] %v983, 128
        %1043 = vxpose.xlu0.b32.cont [6/16] %v985, 128
        %1044 = vxpose.xlu0.b32.cont [7/16] %v987, 128
        %1045 = vxpose.xlu0.b32.cont [8/16] %v989, 128
        %1046 = vxpose.xlu0.b32.cont [9/16] %v991, 128
        %1047 = vxpose.xlu0.b32.cont [10/16] %v993, 128
        %1048 = vxpose.xlu0.b32.cont [11/16] %v995, 128
        %1049 = vxpose.xlu0.b32.cont [12/16] %v997, 128
        %1050 = vxpose.xlu0.b32.cont [13/16] %v999, 128
        %1051 = vxpose.xlu0.b32.cont [14/16] %v1001, 128
        %1052 = vxpose.xlu0.b32.cont [15/16] %v1003, 128
        %1053 = vxpose.xlu0.b32.end [16/16] %v1005, 128
        %v1054 = vpop.trf.xlu0
        %v1055 = vpop.trf.xlu0
        %v1056 = vpop.trf.xlu0
        %v1057 = vpop.trf.xlu0
        %v1058 = vpop.trf.xlu0
        %v1059 = vpop.trf.xlu0
        %v1060 = vpop.trf.xlu0
        %v1061 = vpop.trf.xlu0
        %v1062 = vpop.trf.xlu0
        %v1063 = vpop.trf.xlu0
        %v1064 = vpop.trf.xlu0
        %v1065 = vpop.trf.xlu0
        %v1066 = vpop.trf.xlu0
        %v1067 = vpop.trf.xlu0
        %v1068 = vpop.trf.xlu0
        %v1069 = vpop.trf.xlu0
        %1070 = vxpose.xlu0.b32.start [1/16] %v1007, 128
        %1071 = vxpose.xlu0.b32.cont [2/16] %v1009, 128
        %1072 = vxpose.xlu0.b32.cont [3/16] %v1011, 128
        %1073 = vxpose.xlu0.b32.cont [4/16] %v1013, 128
        %1074 = vxpose.xlu0.b32.cont [5/16] %v1015, 128
        %1075 = vxpose.xlu0.b32.cont [6/16] %v1017, 128
        %1076 = vxpose.xlu0.b32.cont [7/16] %v1019, 128
        %1077 = vxpose.xlu0.b32.cont [8/16] %v1021, 128
        %1078 = vxpose.xlu0.b32.cont [9/16] %v1023, 128
        %1079 = vxpose.xlu0.b32.cont [10/16] %v1025, 128
        %1080 = vxpose.xlu0.b32.cont [11/16] %v1027, 128
        %1081 = vxpose.xlu0.b32.cont [12/16] %v1029, 128
        %1082 = vxpose.xlu0.b32.cont [13/16] %v1031, 128
        %1083 = vxpose.xlu0.b32.cont [14/16] %v1033, 128
        %1084 = vxpose.xlu0.b32.cont [15/16] %v1035, 128
        %1085 = vxpose.xlu0.b32.end [16/16] %v1037, 128
        %v1086 = vpop.trf.xlu0
        %v1087 = vpop.trf.xlu0
        %v1088 = vpop.trf.xlu0
        %v1089 = vpop.trf.xlu0
        %v1090 = vpop.trf.xlu0
        %v1091 = vpop.trf.xlu0
        %v1092 = vpop.trf.xlu0
        %v1093 = vpop.trf.xlu0
        %v1094 = vpop.trf.xlu0
        %v1095 = vpop.trf.xlu0
        %v1096 = vpop.trf.xlu0
        %v1097 = vpop.trf.xlu0
        %v1098 = vpop.trf.xlu0
        %v1099 = vpop.trf.xlu0
        %v1100 = vpop.trf.xlu0
        %v1101 = vpop.trf.xlu0
        %v1102 = vrot.slane %v577, 2
        %v1104 = vadd.f32 %v1054, %v1102
        %v1105 = vadd.f32 %v1086, %v1102
        %v1108 = vcombine.low %v1104, %v1105
        %v1110 = vunpack.c.l.s4 1966171168
        %v1111 = vunpack.c.0.s8 %v1110
        %v1112 = vlaneseq
        %v1113 = vshrl.u32 %v1112, 7
        %v1114 = vsub.s32 %v1111, %v1113
        %v1115 = vrot.slane %v1108, %v1114
        %v1117 = vunpack.c.l.s4 1966171168
        %v1118 = vunpack.c.0.s8 %v1117
        %v1119 = vlaneseq
        %v1120 = vshrl.u32 %v1119, 7
        %v1121 = vsub.s32 %v1118, %v1120
        %v1122 = vrot.slane %v1115, %v1121
        %s1124 = scalar_lea.vmem %s277, 2 [#allocation9]
        %1125 = vst.msk [vmem:[%s1124] ss:$8 sm:$0x3] %vm602, %v1122
        %1126 = vst.msk [vmem:[%s1124] ss:$8 sm:$0x0] %vm602, %v1122
        %v1127 = vlaneseq
        %v1128 = vshrl.u32 %v1127, 7
        %v1129 = vsub.s32 3, %v1128
        %v1130 = vrot.slane %v320, %v1129
        %v1131 = vmul.f32 %v288, %v1130
        %v1132 = vmul.f32 %v289, %v1130
        %v1133 = vmul.f32 %v290, %v1130
        %v1134 = vmul.f32 %v291, %v1130
        %v1135 = vmul.f32 %v292, %v1130
        %v1136 = vmul.f32 %v293, %v1130
        %v1137 = vmul.f32 %v294, %v1130
        %v1138 = vmul.f32 %v295, %v1130
        %v1139 = vmul.f32 %v296, %v1130
        %v1140 = vmul.f32 %v297, %v1130
        %v1141 = vmul.f32 %v298, %v1130
        %v1142 = vmul.f32 %v299, %v1130
        %v1143 = vmul.f32 %v300, %v1130
        %v1144 = vmul.f32 %v301, %v1130
        %v1145 = vmul.f32 %v302, %v1130
        %v1146 = vmul.f32 %v303, %v1130
        %v1147 = vmul.f32 %v304, %v1130
        %v1148 = vmul.f32 %v305, %v1130
        %v1149 = vmul.f32 %v306, %v1130
        %v1150 = vmul.f32 %v307, %v1130
        %v1151 = vmul.f32 %v308, %v1130
        %v1152 = vmul.f32 %v309, %v1130
        %v1153 = vmul.f32 %v310, %v1130
        %v1154 = vmul.f32 %v311, %v1130
        %v1155 = vmul.f32 %v312, %v1130
        %v1156 = vmul.f32 %v313, %v1130
        %v1157 = vmul.f32 %v314, %v1130
        %v1158 = vmul.f32 %v315, %v1130
        %v1159 = vmul.f32 %v316, %v1130
        %v1160 = vmul.f32 %v317, %v1130
        %v1161 = vmul.f32 %v318, %v1130
        %v1162 = vmul.f32 %v319, %v1130
        %v1163 = vmax.f32 %v1131, 0.0
        %v1164 = vmax.f32 %v1132, 0.0
        %v1165 = vmax.f32 %v1133, 0.0
        %v1166 = vmax.f32 %v1134, 0.0
        %v1167 = vmax.f32 %v1135, 0.0
        %v1168 = vmax.f32 %v1136, 0.0
        %v1169 = vmax.f32 %v1137, 0.0
        %v1170 = vmax.f32 %v1138, 0.0
        %v1171 = vmax.f32 %v1139, 0.0
        %v1172 = vmax.f32 %v1140, 0.0
        %v1173 = vmax.f32 %v1141, 0.0
        %v1174 = vmax.f32 %v1142, 0.0
        %v1175 = vmax.f32 %v1143, 0.0
        %v1176 = vmax.f32 %v1144, 0.0
        %v1177 = vmax.f32 %v1145, 0.0
        %v1178 = vmax.f32 %v1146, 0.0
        %v1179 = vmax.f32 %v1147, 0.0
        %v1180 = vmax.f32 %v1148, 0.0
        %v1181 = vmax.f32 %v1149, 0.0
        %v1182 = vmax.f32 %v1150, 0.0
        %v1183 = vmax.f32 %v1151, 0.0
        %v1184 = vmax.f32 %v1152, 0.0
        %v1185 = vmax.f32 %v1153, 0.0
        %v1186 = vmax.f32 %v1154, 0.0
        %v1187 = vmax.f32 %v1155, 0.0
        %v1188 = vmax.f32 %v1156, 0.0
        %v1189 = vmax.f32 %v1157, 0.0
        %v1190 = vmax.f32 %v1158, 0.0
        %v1191 = vmax.f32 %v1159, 0.0
        %v1192 = vmax.f32 %v1160, 0.0
        %v1193 = vmax.f32 %v1161, 0.0
        %v1194 = vmax.f32 %v1162, 0.0
        %v1195 = vsel %vm393, %v407, %v404
        %v1196 = vsel %vm396, %v410, %v1195
        %v1197 = vsel %vm399, %v321, %v1196
        %v1198 = vsel %vm402, %v392, %v1197
        %v1199 = vsel %vm405, %v395, %v1198
        %v1200 = vsel %vm408, %v398, %v1199
        %v1201 = vsel %vm411, %v401, %v1200
        %v1203 = vmul.f32 %v1163, %v1201
        %v1204 = vmul.f32 %v1164, %v1201
        %v1205 = vmul.f32 %v1165, %v1201
        %v1206 = vmul.f32 %v1166, %v1201
        %v1207 = vmul.f32 %v1167, %v1201
        %v1208 = vmul.f32 %v1168, %v1201
        %v1209 = vmul.f32 %v1169, %v1201
        %v1210 = vmul.f32 %v1170, %v1201
        %v1211 = vmul.f32 %v1171, %v1201
        %v1212 = vmul.f32 %v1172, %v1201
        %v1213 = vmul.f32 %v1173, %v1201
        %v1214 = vmul.f32 %v1174, %v1201
        %v1215 = vmul.f32 %v1175, %v1201
        %v1216 = vmul.f32 %v1176, %v1201
        %v1217 = vmul.f32 %v1177, %v1201
        %v1218 = vmul.f32 %v1178, %v1201
        %v1219 = vmul.f32 %v1179, %v1201
        %v1220 = vmul.f32 %v1180, %v1201
        %v1221 = vmul.f32 %v1181, %v1201
        %v1222 = vmul.f32 %v1182, %v1201
        %v1223 = vmul.f32 %v1183, %v1201
        %v1224 = vmul.f32 %v1184, %v1201
        %v1225 = vmul.f32 %v1185, %v1201
        %v1226 = vmul.f32 %v1186, %v1201
        %v1227 = vmul.f32 %v1187, %v1201
        %v1228 = vmul.f32 %v1188, %v1201
        %v1229 = vmul.f32 %v1189, %v1201
        %v1230 = vmul.f32 %v1190, %v1201
        %v1231 = vmul.f32 %v1191, %v1201
        %v1232 = vmul.f32 %v1192, %v1201
        %v1233 = vmul.f32 %v1193, %v1201
        %v1234 = vmul.f32 %v1194, %v1201
        %1235 = vadd.xlane.f32.xlu0 %v1203
        %v1236 = vpop.xlane.xlu0 %1235
        %1237 = vadd.xlane.f32.xlu0 %v1204
        %v1238 = vpop.xlane.xlu0 %1237
        %1239 = vadd.xlane.f32.xlu0 %v1205
        %v1240 = vpop.xlane.xlu0 %1239
        %1241 = vadd.xlane.f32.xlu0 %v1206
        %v1242 = vpop.xlane.xlu0 %1241
        %1243 = vadd.xlane.f32.xlu0 %v1207
        %v1244 = vpop.xlane.xlu0 %1243
        %1245 = vadd.xlane.f32.xlu0 %v1208
        %v1246 = vpop.xlane.xlu0 %1245
        %1247 = vadd.xlane.f32.xlu0 %v1209
        %v1248 = vpop.xlane.xlu0 %1247
        %1249 = vadd.xlane.f32.xlu0 %v1210
        %v1250 = vpop.xlane.xlu0 %1249
        %1251 = vadd.xlane.f32.xlu0 %v1211
        %v1252 = vpop.xlane.xlu0 %1251
        %1253 = vadd.xlane.f32.xlu0 %v1212
        %v1254 = vpop.xlane.xlu0 %1253
        %1255 = vadd.xlane.f32.xlu0 %v1213
        %v1256 = vpop.xlane.xlu0 %1255
        %1257 = vadd.xlane.f32.xlu0 %v1214
        %v1258 = vpop.xlane.xlu0 %1257
        %1259 = vadd.xlane.f32.xlu0 %v1215
        %v1260 = vpop.xlane.xlu0 %1259
        %1261 = vadd.xlane.f32.xlu0 %v1216
        %v1262 = vpop.xlane.xlu0 %1261
        %1263 = vadd.xlane.f32.xlu0 %v1217
        %v1264 = vpop.xlane.xlu0 %1263
        %1265 = vadd.xlane.f32.xlu0 %v1218
        %v1266 = vpop.xlane.xlu0 %1265
        %1267 = vadd.xlane.f32.xlu0 %v1219
        %v1268 = vpop.xlane.xlu0 %1267
        %1269 = vadd.xlane.f32.xlu0 %v1220
        %v1270 = vpop.xlane.xlu0 %1269
        %1271 = vadd.xlane.f32.xlu0 %v1221
        %v1272 = vpop.xlane.xlu0 %1271
        %1273 = vadd.xlane.f32.xlu0 %v1222
        %v1274 = vpop.xlane.xlu0 %1273
        %1275 = vadd.xlane.f32.xlu0 %v1223
        %v1276 = vpop.xlane.xlu0 %1275
        %1277 = vadd.xlane.f32.xlu0 %v1224
        %v1278 = vpop.xlane.xlu0 %1277
        %1279 = vadd.xlane.f32.xlu0 %v1225
        %v1280 = vpop.xlane.xlu0 %1279
        %1281 = vadd.xlane.f32.xlu0 %v1226
        %v1282 = vpop.xlane.xlu0 %1281
        %1283 = vadd.xlane.f32.xlu0 %v1227
        %v1284 = vpop.xlane.xlu0 %1283
        %1285 = vadd.xlane.f32.xlu0 %v1228
        %v1286 = vpop.xlane.xlu0 %1285
        %1287 = vadd.xlane.f32.xlu0 %v1229
        %v1288 = vpop.xlane.xlu0 %1287
        %1289 = vadd.xlane.f32.xlu0 %v1230
        %v1290 = vpop.xlane.xlu0 %1289
        %1291 = vadd.xlane.f32.xlu0 %v1231
        %v1292 = vpop.xlane.xlu0 %1291
        %1293 = vadd.xlane.f32.xlu0 %v1232
        %v1294 = vpop.xlane.xlu0 %1293
        %1295 = vadd.xlane.f32.xlu0 %v1233
        %v1296 = vpop.xlane.xlu0 %1295
        %1297 = vadd.xlane.f32.xlu0 %v1234
        %v1298 = vpop.xlane.xlu0 %1297
        %1299 = vxpose.xlu0.b32.start [1/16] %v1236, 128
        %1300 = vxpose.xlu0.b32.cont [2/16] %v1238, 128
        %1301 = vxpose.xlu0.b32.cont [3/16] %v1240, 128
        %1302 = vxpose.xlu0.b32.cont [4/16] %v1242, 128
        %1303 = vxpose.xlu0.b32.cont [5/16] %v1244, 128
        %1304 = vxpose.xlu0.b32.cont [6/16] %v1246, 128
        %1305 = vxpose.xlu0.b32.cont [7/16] %v1248, 128
        %1306 = vxpose.xlu0.b32.cont [8/16] %v1250, 128
        %1307 = vxpose.xlu0.b32.cont [9/16] %v1252, 128
        %1308 = vxpose.xlu0.b32.cont [10/16] %v1254, 128
        %1309 = vxpose.xlu0.b32.cont [11/16] %v1256, 128
        %1310 = vxpose.xlu0.b32.cont [12/16] %v1258, 128
        %1311 = vxpose.xlu0.b32.cont [13/16] %v1260, 128
        %1312 = vxpose.xlu0.b32.cont [14/16] %v1262, 128
        %1313 = vxpose.xlu0.b32.cont [15/16] %v1264, 128
        %1314 = vxpose.xlu0.b32.end [16/16] %v1266, 128
        %v1315 = vpop.trf.xlu0
        %v1316 = vpop.trf.xlu0
        %v1317 = vpop.trf.xlu0
        %v1318 = vpop.trf.xlu0
        %v1319 = vpop.trf.xlu0
        %v1320 = vpop.trf.xlu0
        %v1321 = vpop.trf.xlu0
        %v1322 = vpop.trf.xlu0
        %v1323 = vpop.trf.xlu0
        %v1324 = vpop.trf.xlu0
        %v1325 = vpop.trf.xlu0
        %v1326 = vpop.trf.xlu0
        %v1327 = vpop.trf.xlu0
        %v1328 = vpop.trf.xlu0
        %v1329 = vpop.trf.xlu0
        %v1330 = vpop.trf.xlu0
        %1331 = vxpose.xlu0.b32.start [1/16] %v1268, 128
        %1332 = vxpose.xlu0.b32.cont [2/16] %v1270, 128
        %1333 = vxpose.xlu0.b32.cont [3/16] %v1272, 128
        %1334 = vxpose.xlu0.b32.cont [4/16] %v1274, 128
        %1335 = vxpose.xlu0.b32.cont [5/16] %v1276, 128
        %1336 = vxpose.xlu0.b32.cont [6/16] %v1278, 128
        %1337 = vxpose.xlu0.b32.cont [7/16] %v1280, 128
        %1338 = vxpose.xlu0.b32.cont [8/16] %v1282, 128
        %1339 = vxpose.xlu0.b32.cont [9/16] %v1284, 128
        %1340 = vxpose.xlu0.b32.cont [10/16] %v1286, 128
        %1341 = vxpose.xlu0.b32.cont [11/16] %v1288, 128
        %1342 = vxpose.xlu0.b32.cont [12/16] %v1290, 128
        %1343 = vxpose.xlu0.b32.cont [13/16] %v1292, 128
        %1344 = vxpose.xlu0.b32.cont [14/16] %v1294, 128
        %1345 = vxpose.xlu0.b32.cont [15/16] %v1296, 128
        %1346 = vxpose.xlu0.b32.end [16/16] %v1298, 128
        %v1347 = vpop.trf.xlu0
        %v1348 = vpop.trf.xlu0
        %v1349 = vpop.trf.xlu0
        %v1350 = vpop.trf.xlu0
        %v1351 = vpop.trf.xlu0
        %v1352 = vpop.trf.xlu0
        %v1353 = vpop.trf.xlu0
        %v1354 = vpop.trf.xlu0
        %v1355 = vpop.trf.xlu0
        %v1356 = vpop.trf.xlu0
        %v1357 = vpop.trf.xlu0
        %v1358 = vpop.trf.xlu0
        %v1359 = vpop.trf.xlu0
        %v1360 = vpop.trf.xlu0
        %v1361 = vpop.trf.xlu0
        %v1362 = vpop.trf.xlu0
        %v1363 = vrot.slane %v577, 3
        %v1365 = vadd.f32 %v1315, %v1363
        %v1366 = vadd.f32 %v1347, %v1363
        %v1369 = vcombine.low %v1365, %v1366
        %v1371 = vunpack.c.l.s4 1966171168
        %v1372 = vunpack.c.0.s8 %v1371
        %v1373 = vlaneseq
        %v1374 = vshrl.u32 %v1373, 7
        %v1375 = vsub.s32 %v1372, %v1374
        %v1376 = vrot.slane %v1369, %v1375
        %v1378 = vunpack.c.l.s4 1966171168
        %v1379 = vunpack.c.0.s8 %v1378
        %v1380 = vlaneseq
        %v1381 = vshrl.u32 %v1380, 7
        %v1382 = vsub.s32 %v1379, %v1381
        %v1383 = vrot.slane %v1376, %v1382
        %s1385 = scalar_lea.vmem %s277, 3 [#allocation9]
        %1386 = vst.msk [vmem:[%s1385] ss:$8 sm:$0x3] %vm602, %v1383
        %1387 = vst.msk [vmem:[%s1385] ss:$8 sm:$0x0] %vm602, %v1383
        %v1388 = vlaneseq
        %v1389 = vshrl.u32 %v1388, 7
        %v1390 = vsub.s32 4, %v1389
        %v1391 = vrot.slane %v320, %v1390
        %v1392 = vmul.f32 %v288, %v1391
        %v1393 = vmul.f32 %v289, %v1391
        %v1394 = vmul.f32 %v290, %v1391
        %v1395 = vmul.f32 %v291, %v1391
        %v1396 = vmul.f32 %v292, %v1391
        %v1397 = vmul.f32 %v293, %v1391
        %v1398 = vmul.f32 %v294, %v1391
        %v1399 = vmul.f32 %v295, %v1391
        %v1400 = vmul.f32 %v296, %v1391
        %v1401 = vmul.f32 %v297, %v1391
        %v1402 = vmul.f32 %v298, %v1391
        %v1403 = vmul.f32 %v299, %v1391
        %v1404 = vmul.f32 %v300, %v1391
        %v1405 = vmul.f32 %v301, %v1391
        %v1406 = vmul.f32 %v302, %v1391
        %v1407 = vmul.f32 %v303, %v1391
        %v1408 = vmul.f32 %v304, %v1391
        %v1409 = vmul.f32 %v305, %v1391
        %v1410 = vmul.f32 %v306, %v1391
        %v1411 = vmul.f32 %v307, %v1391
        %v1412 = vmul.f32 %v308, %v1391
        %v1413 = vmul.f32 %v309, %v1391
        %v1414 = vmul.f32 %v310, %v1391
        %v1415 = vmul.f32 %v311, %v1391
        %v1416 = vmul.f32 %v312, %v1391
        %v1417 = vmul.f32 %v313, %v1391
        %v1418 = vmul.f32 %v314, %v1391
        %v1419 = vmul.f32 %v315, %v1391
        %v1420 = vmul.f32 %v316, %v1391
        %v1421 = vmul.f32 %v317, %v1391
        %v1422 = vmul.f32 %v318, %v1391
        %v1423 = vmul.f32 %v319, %v1391
        %v1424 = vmax.f32 %v1392, 0.0
        %v1425 = vmax.f32 %v1393, 0.0
        %v1426 = vmax.f32 %v1394, 0.0
        %v1427 = vmax.f32 %v1395, 0.0
        %v1428 = vmax.f32 %v1396, 0.0
        %v1429 = vmax.f32 %v1397, 0.0
        %v1430 = vmax.f32 %v1398, 0.0
        %v1431 = vmax.f32 %v1399, 0.0
        %v1432 = vmax.f32 %v1400, 0.0
        %v1433 = vmax.f32 %v1401, 0.0
        %v1434 = vmax.f32 %v1402, 0.0
        %v1435 = vmax.f32 %v1403, 0.0
        %v1436 = vmax.f32 %v1404, 0.0
        %v1437 = vmax.f32 %v1405, 0.0
        %v1438 = vmax.f32 %v1406, 0.0
        %v1439 = vmax.f32 %v1407, 0.0
        %v1440 = vmax.f32 %v1408, 0.0
        %v1441 = vmax.f32 %v1409, 0.0
        %v1442 = vmax.f32 %v1410, 0.0
        %v1443 = vmax.f32 %v1411, 0.0
        %v1444 = vmax.f32 %v1412, 0.0
        %v1445 = vmax.f32 %v1413, 0.0
        %v1446 = vmax.f32 %v1414, 0.0
        %v1447 = vmax.f32 %v1415, 0.0
        %v1448 = vmax.f32 %v1416, 0.0
        %v1449 = vmax.f32 %v1417, 0.0
        %v1450 = vmax.f32 %v1418, 0.0
        %v1451 = vmax.f32 %v1419, 0.0
        %v1452 = vmax.f32 %v1420, 0.0
        %v1453 = vmax.f32 %v1421, 0.0
        %v1454 = vmax.f32 %v1422, 0.0
        %v1455 = vmax.f32 %v1423, 0.0
        %v1456 = vsel %vm393, %v404, %v401
        %v1457 = vsel %vm396, %v407, %v1456
        %v1458 = vsel %vm399, %v410, %v1457
        %v1459 = vsel %vm402, %v321, %v1458
        %v1460 = vsel %vm405, %v392, %v1459
        %v1461 = vsel %vm408, %v395, %v1460
        %v1462 = vsel %vm411, %v398, %v1461
        %v1464 = vmul.f32 %v1424, %v1462
        %v1465 = vmul.f32 %v1425, %v1462
        %v1466 = vmul.f32 %v1426, %v1462
        %v1467 = vmul.f32 %v1427, %v1462
        %v1468 = vmul.f32 %v1428, %v1462
        %v1469 = vmul.f32 %v1429, %v1462
        %v1470 = vmul.f32 %v1430, %v1462
        %v1471 = vmul.f32 %v1431, %v1462
        %v1472 = vmul.f32 %v1432, %v1462
        %v1473 = vmul.f32 %v1433, %v1462
        %v1474 = vmul.f32 %v1434, %v1462
        %v1475 = vmul.f32 %v1435, %v1462
        %v1476 = vmul.f32 %v1436, %v1462
        %v1477 = vmul.f32 %v1437, %v1462
        %v1478 = vmul.f32 %v1438, %v1462
        %v1479 = vmul.f32 %v1439, %v1462
        %v1480 = vmul.f32 %v1440, %v1462
        %v1481 = vmul.f32 %v1441, %v1462
        %v1482 = vmul.f32 %v1442, %v1462
        %v1483 = vmul.f32 %v1443, %v1462
        %v1484 = vmul.f32 %v1444, %v1462
        %v1485 = vmul.f32 %v1445, %v1462
        %v1486 = vmul.f32 %v1446, %v1462
        %v1487 = vmul.f32 %v1447, %v1462
        %v1488 = vmul.f32 %v1448, %v1462
        %v1489 = vmul.f32 %v1449, %v1462
        %v1490 = vmul.f32 %v1450, %v1462
        %v1491 = vmul.f32 %v1451, %v1462
        %v1492 = vmul.f32 %v1452, %v1462
        %v1493 = vmul.f32 %v1453, %v1462
        %v1494 = vmul.f32 %v1454, %v1462
        %v1495 = vmul.f32 %v1455, %v1462
        %1496 = vadd.xlane.f32.xlu0 %v1464
        %v1497 = vpop.xlane.xlu0 %1496
        %1498 = vadd.xlane.f32.xlu0 %v1465
        %v1499 = vpop.xlane.xlu0 %1498
        %1500 = vadd.xlane.f32.xlu0 %v1466
        %v1501 = vpop.xlane.xlu0 %1500
        %1502 = vadd.xlane.f32.xlu0 %v1467
        %v1503 = vpop.xlane.xlu0 %1502
        %1504 = vadd.xlane.f32.xlu0 %v1468
        %v1505 = vpop.xlane.xlu0 %1504
        %1506 = vadd.xlane.f32.xlu0 %v1469
        %v1507 = vpop.xlane.xlu0 %1506
        %1508 = vadd.xlane.f32.xlu0 %v1470
        %v1509 = vpop.xlane.xlu0 %1508
        %1510 = vadd.xlane.f32.xlu0 %v1471
        %v1511 = vpop.xlane.xlu0 %1510
        %1512 = vadd.xlane.f32.xlu0 %v1472
        %v1513 = vpop.xlane.xlu0 %1512
        %1514 = vadd.xlane.f32.xlu0 %v1473
        %v1515 = vpop.xlane.xlu0 %1514
        %1516 = vadd.xlane.f32.xlu0 %v1474
        %v1517 = vpop.xlane.xlu0 %1516
        %1518 = vadd.xlane.f32.xlu0 %v1475
        %v1519 = vpop.xlane.xlu0 %1518
        %1520 = vadd.xlane.f32.xlu0 %v1476
        %v1521 = vpop.xlane.xlu0 %1520
        %1522 = vadd.xlane.f32.xlu0 %v1477
        %v1523 = vpop.xlane.xlu0 %1522
        %1524 = vadd.xlane.f32.xlu0 %v1478
        %v1525 = vpop.xlane.xlu0 %1524
        %1526 = vadd.xlane.f32.xlu0 %v1479
        %v1527 = vpop.xlane.xlu0 %1526
        %1528 = vadd.xlane.f32.xlu0 %v1480
        %v1529 = vpop.xlane.xlu0 %1528
        %1530 = vadd.xlane.f32.xlu0 %v1481
        %v1531 = vpop.xlane.xlu0 %1530
        %1532 = vadd.xlane.f32.xlu0 %v1482
        %v1533 = vpop.xlane.xlu0 %1532
        %1534 = vadd.xlane.f32.xlu0 %v1483
        %v1535 = vpop.xlane.xlu0 %1534
        %1536 = vadd.xlane.f32.xlu0 %v1484
        %v1537 = vpop.xlane.xlu0 %1536
        %1538 = vadd.xlane.f32.xlu0 %v1485
        %v1539 = vpop.xlane.xlu0 %1538
        %1540 = vadd.xlane.f32.xlu0 %v1486
        %v1541 = vpop.xlane.xlu0 %1540
        %1542 = vadd.xlane.f32.xlu0 %v1487
        %v1543 = vpop.xlane.xlu0 %1542
        %1544 = vadd.xlane.f32.xlu0 %v1488
        %v1545 = vpop.xlane.xlu0 %1544
        %1546 = vadd.xlane.f32.xlu0 %v1489
        %v1547 = vpop.xlane.xlu0 %1546
        %1548 = vadd.xlane.f32.xlu0 %v1490
        %v1549 = vpop.xlane.xlu0 %1548
        %1550 = vadd.xlane.f32.xlu0 %v1491
        %v1551 = vpop.xlane.xlu0 %1550
        %1552 = vadd.xlane.f32.xlu0 %v1492
        %v1553 = vpop.xlane.xlu0 %1552
        %1554 = vadd.xlane.f32.xlu0 %v1493
        %v1555 = vpop.xlane.xlu0 %1554
        %1556 = vadd.xlane.f32.xlu0 %v1494
        %v1557 = vpop.xlane.xlu0 %1556
        %1558 = vadd.xlane.f32.xlu0 %v1495
        %v1559 = vpop.xlane.xlu0 %1558
        %1560 = vxpose.xlu0.b32.start [1/16] %v1497, 128
        %1561 = vxpose.xlu0.b32.cont [2/16] %v1499, 128
        %1562 = vxpose.xlu0.b32.cont [3/16] %v1501, 128
        %1563 = vxpose.xlu0.b32.cont [4/16] %v1503, 128
        %1564 = vxpose.xlu0.b32.cont [5/16] %v1505, 128
        %1565 = vxpose.xlu0.b32.cont [6/16] %v1507, 128
        %1566 = vxpose.xlu0.b32.cont [7/16] %v1509, 128
        %1567 = vxpose.xlu0.b32.cont [8/16] %v1511, 128
        %1568 = vxpose.xlu0.b32.cont [9/16] %v1513, 128
        %1569 = vxpose.xlu0.b32.cont [10/16] %v1515, 128
        %1570 = vxpose.xlu0.b32.cont [11/16] %v1517, 128
        %1571 = vxpose.xlu0.b32.cont [12/16] %v1519, 128
        %1572 = vxpose.xlu0.b32.cont [13/16] %v1521, 128
        %1573 = vxpose.xlu0.b32.cont [14/16] %v1523, 128
        %1574 = vxpose.xlu0.b32.cont [15/16] %v1525, 128
        %1575 = vxpose.xlu0.b32.end [16/16] %v1527, 128
        %v1576 = vpop.trf.xlu0
        %v1577 = vpop.trf.xlu0
        %v1578 = vpop.trf.xlu0
        %v1579 = vpop.trf.xlu0
        %v1580 = vpop.trf.xlu0
        %v1581 = vpop.trf.xlu0
        %v1582 = vpop.trf.xlu0
        %v1583 = vpop.trf.xlu0
        %v1584 = vpop.trf.xlu0
        %v1585 = vpop.trf.xlu0
        %v1586 = vpop.trf.xlu0
        %v1587 = vpop.trf.xlu0
        %v1588 = vpop.trf.xlu0
        %v1589 = vpop.trf.xlu0
        %v1590 = vpop.trf.xlu0
        %v1591 = vpop.trf.xlu0
        %1592 = vxpose.xlu0.b32.start [1/16] %v1529, 128
        %1593 = vxpose.xlu0.b32.cont [2/16] %v1531, 128
        %1594 = vxpose.xlu0.b32.cont [3/16] %v1533, 128
        %1595 = vxpose.xlu0.b32.cont [4/16] %v1535, 128
        %1596 = vxpose.xlu0.b32.cont [5/16] %v1537, 128
        %1597 = vxpose.xlu0.b32.cont [6/16] %v1539, 128
        %1598 = vxpose.xlu0.b32.cont [7/16] %v1541, 128
        %1599 = vxpose.xlu0.b32.cont [8/16] %v1543, 128
        %1600 = vxpose.xlu0.b32.cont [9/16] %v1545, 128
        %1601 = vxpose.xlu0.b32.cont [10/16] %v1547, 128
        %1602 = vxpose.xlu0.b32.cont [11/16] %v1549, 128
        %1603 = vxpose.xlu0.b32.cont [12/16] %v1551, 128
        %1604 = vxpose.xlu0.b32.cont [13/16] %v1553, 128
        %1605 = vxpose.xlu0.b32.cont [14/16] %v1555, 128
        %1606 = vxpose.xlu0.b32.cont [15/16] %v1557, 128
        %1607 = vxpose.xlu0.b32.end [16/16] %v1559, 128
        %v1608 = vpop.trf.xlu0
        %v1609 = vpop.trf.xlu0
        %v1610 = vpop.trf.xlu0
        %v1611 = vpop.trf.xlu0
        %v1612 = vpop.trf.xlu0
        %v1613 = vpop.trf.xlu0
        %v1614 = vpop.trf.xlu0
        %v1615 = vpop.trf.xlu0
        %v1616 = vpop.trf.xlu0
        %v1617 = vpop.trf.xlu0
        %v1618 = vpop.trf.xlu0
        %v1619 = vpop.trf.xlu0
        %v1620 = vpop.trf.xlu0
        %v1621 = vpop.trf.xlu0
        %v1622 = vpop.trf.xlu0
        %v1623 = vpop.trf.xlu0
        %v1624 = vrot.slane %v577, 4
        %v1626 = vadd.f32 %v1576, %v1624
        %v1627 = vadd.f32 %v1608, %v1624
        %v1630 = vcombine.low %v1626, %v1627
        %v1632 = vunpack.c.l.s4 1966171168
        %v1633 = vunpack.c.0.s8 %v1632
        %v1634 = vlaneseq
        %v1635 = vshrl.u32 %v1634, 7
        %v1636 = vsub.s32 %v1633, %v1635
        %v1637 = vrot.slane %v1630, %v1636
        %v1639 = vunpack.c.l.s4 1966171168
        %v1640 = vunpack.c.0.s8 %v1639
        %v1641 = vlaneseq
        %v1642 = vshrl.u32 %v1641, 7
        %v1643 = vsub.s32 %v1640, %v1642
        %v1644 = vrot.slane %v1637, %v1643
        %s1646 = scalar_lea.vmem %s277, 4 [#allocation9]
        %1647 = vst.msk [vmem:[%s1646] ss:$8 sm:$0x3] %vm602, %v1644
        %1648 = vst.msk [vmem:[%s1646] ss:$8 sm:$0x0] %vm602, %v1644
        %v1649 = vlaneseq
        %v1650 = vshrl.u32 %v1649, 7
        %v1651 = vsub.s32 5, %v1650
        %v1652 = vrot.slane %v320, %v1651
        %v1653 = vmul.f32 %v288, %v1652
        %v1654 = vmul.f32 %v289, %v1652
        %v1655 = vmul.f32 %v290, %v1652
        %v1656 = vmul.f32 %v291, %v1652
        %v1657 = vmul.f32 %v292, %v1652
        %v1658 = vmul.f32 %v293, %v1652
        %v1659 = vmul.f32 %v294, %v1652
        %v1660 = vmul.f32 %v295, %v1652
        %v1661 = vmul.f32 %v296, %v1652
        %v1662 = vmul.f32 %v297, %v1652
        %v1663 = vmul.f32 %v298, %v1652
        %v1664 = vmul.f32 %v299, %v1652
        %v1665 = vmul.f32 %v300, %v1652
        %v1666 = vmul.f32 %v301, %v1652
        %v1667 = vmul.f32 %v302, %v1652
        %v1668 = vmul.f32 %v303, %v1652
        %v1669 = vmul.f32 %v304, %v1652
        %v1670 = vmul.f32 %v305, %v1652
        %v1671 = vmul.f32 %v306, %v1652
        %v1672 = vmul.f32 %v307, %v1652
        %v1673 = vmul.f32 %v308, %v1652
        %v1674 = vmul.f32 %v309, %v1652
        %v1675 = vmul.f32 %v310, %v1652
        %v1676 = vmul.f32 %v311, %v1652
        %v1677 = vmul.f32 %v312, %v1652
        %v1678 = vmul.f32 %v313, %v1652
        %v1679 = vmul.f32 %v314, %v1652
        %v1680 = vmul.f32 %v315, %v1652
        %v1681 = vmul.f32 %v316, %v1652
        %v1682 = vmul.f32 %v317, %v1652
        %v1683 = vmul.f32 %v318, %v1652
        %v1684 = vmul.f32 %v319, %v1652
        %v1685 = vmax.f32 %v1653, 0.0
        %v1686 = vmax.f32 %v1654, 0.0
        %v1687 = vmax.f32 %v1655, 0.0
        %v1688 = vmax.f32 %v1656, 0.0
        %v1689 = vmax.f32 %v1657, 0.0
        %v1690 = vmax.f32 %v1658, 0.0
        %v1691 = vmax.f32 %v1659, 0.0
        %v1692 = vmax.f32 %v1660, 0.0
        %v1693 = vmax.f32 %v1661, 0.0
        %v1694 = vmax.f32 %v1662, 0.0
        %v1695 = vmax.f32 %v1663, 0.0
        %v1696 = vmax.f32 %v1664, 0.0
        %v1697 = vmax.f32 %v1665, 0.0
        %v1698 = vmax.f32 %v1666, 0.0
        %v1699 = vmax.f32 %v1667, 0.0
        %v1700 = vmax.f32 %v1668, 0.0
        %v1701 = vmax.f32 %v1669, 0.0
        %v1702 = vmax.f32 %v1670, 0.0
        %v1703 = vmax.f32 %v1671, 0.0
        %v1704 = vmax.f32 %v1672, 0.0
        %v1705 = vmax.f32 %v1673, 0.0
        %v1706 = vmax.f32 %v1674, 0.0
        %v1707 = vmax.f32 %v1675, 0.0
        %v1708 = vmax.f32 %v1676, 0.0
        %v1709 = vmax.f32 %v1677, 0.0
        %v1710 = vmax.f32 %v1678, 0.0
        %v1711 = vmax.f32 %v1679, 0.0
        %v1712 = vmax.f32 %v1680, 0.0
        %v1713 = vmax.f32 %v1681, 0.0
        %v1714 = vmax.f32 %v1682, 0.0
        %v1715 = vmax.f32 %v1683, 0.0
        %v1716 = vmax.f32 %v1684, 0.0
        %v1717 = vsel %vm393, %v401, %v398
        %v1718 = vsel %vm396, %v404, %v1717
        %v1719 = vsel %vm399, %v407, %v1718
        %v1720 = vsel %vm402, %v410, %v1719
        %v1721 = vsel %vm405, %v321, %v1720
        %v1722 = vsel %vm408, %v392, %v1721
        %v1723 = vsel %vm411, %v395, %v1722
        %v1725 = vmul.f32 %v1685, %v1723
        %v1726 = vmul.f32 %v1686, %v1723
        %v1727 = vmul.f32 %v1687, %v1723
        %v1728 = vmul.f32 %v1688, %v1723
        %v1729 = vmul.f32 %v1689, %v1723
        %v1730 = vmul.f32 %v1690, %v1723
        %v1731 = vmul.f32 %v1691, %v1723
        %v1732 = vmul.f32 %v1692, %v1723
        %v1733 = vmul.f32 %v1693, %v1723
        %v1734 = vmul.f32 %v1694, %v1723
        %v1735 = vmul.f32 %v1695, %v1723
        %v1736 = vmul.f32 %v1696, %v1723
        %v1737 = vmul.f32 %v1697, %v1723
        %v1738 = vmul.f32 %v1698, %v1723
        %v1739 = vmul.f32 %v1699, %v1723
        %v1740 = vmul.f32 %v1700, %v1723
        %v1741 = vmul.f32 %v1701, %v1723
        %v1742 = vmul.f32 %v1702, %v1723
        %v1743 = vmul.f32 %v1703, %v1723
        %v1744 = vmul.f32 %v1704, %v1723
        %v1745 = vmul.f32 %v1705, %v1723
        %v1746 = vmul.f32 %v1706, %v1723
        %v1747 = vmul.f32 %v1707, %v1723
        %v1748 = vmul.f32 %v1708, %v1723
        %v1749 = vmul.f32 %v1709, %v1723
        %v1750 = vmul.f32 %v1710, %v1723
        %v1751 = vmul.f32 %v1711, %v1723
        %v1752 = vmul.f32 %v1712, %v1723
        %v1753 = vmul.f32 %v1713, %v1723
        %v1754 = vmul.f32 %v1714, %v1723
        %v1755 = vmul.f32 %v1715, %v1723
        %v1756 = vmul.f32 %v1716, %v1723
        %1757 = vadd.xlane.f32.xlu0 %v1725
        %v1758 = vpop.xlane.xlu0 %1757
        %1759 = vadd.xlane.f32.xlu0 %v1726
        %v1760 = vpop.xlane.xlu0 %1759
        %1761 = vadd.xlane.f32.xlu0 %v1727
        %v1762 = vpop.xlane.xlu0 %1761
        %1763 = vadd.xlane.f32.xlu0 %v1728
        %v1764 = vpop.xlane.xlu0 %1763
        %1765 = vadd.xlane.f32.xlu0 %v1729
        %v1766 = vpop.xlane.xlu0 %1765
        %1767 = vadd.xlane.f32.xlu0 %v1730
        %v1768 = vpop.xlane.xlu0 %1767
        %1769 = vadd.xlane.f32.xlu0 %v1731
        %v1770 = vpop.xlane.xlu0 %1769
        %1771 = vadd.xlane.f32.xlu0 %v1732
        %v1772 = vpop.xlane.xlu0 %1771
        %1773 = vadd.xlane.f32.xlu0 %v1733
        %v1774 = vpop.xlane.xlu0 %1773
        %1775 = vadd.xlane.f32.xlu0 %v1734
        %v1776 = vpop.xlane.xlu0 %1775
        %1777 = vadd.xlane.f32.xlu0 %v1735
        %v1778 = vpop.xlane.xlu0 %1777
        %1779 = vadd.xlane.f32.xlu0 %v1736
        %v1780 = vpop.xlane.xlu0 %1779
        %1781 = vadd.xlane.f32.xlu0 %v1737
        %v1782 = vpop.xlane.xlu0 %1781
        %1783 = vadd.xlane.f32.xlu0 %v1738
        %v1784 = vpop.xlane.xlu0 %1783
        %1785 = vadd.xlane.f32.xlu0 %v1739
        %v1786 = vpop.xlane.xlu0 %1785
        %1787 = vadd.xlane.f32.xlu0 %v1740
        %v1788 = vpop.xlane.xlu0 %1787
        %1789 = vadd.xlane.f32.xlu0 %v1741
        %v1790 = vpop.xlane.xlu0 %1789
        %1791 = vadd.xlane.f32.xlu0 %v1742
        %v1792 = vpop.xlane.xlu0 %1791
        %1793 = vadd.xlane.f32.xlu0 %v1743
        %v1794 = vpop.xlane.xlu0 %1793
        %1795 = vadd.xlane.f32.xlu0 %v1744
        %v1796 = vpop.xlane.xlu0 %1795
        %1797 = vadd.xlane.f32.xlu0 %v1745
        %v1798 = vpop.xlane.xlu0 %1797
        %1799 = vadd.xlane.f32.xlu0 %v1746
        %v1800 = vpop.xlane.xlu0 %1799
        %1801 = vadd.xlane.f32.xlu0 %v1747
        %v1802 = vpop.xlane.xlu0 %1801
        %1803 = vadd.xlane.f32.xlu0 %v1748
        %v1804 = vpop.xlane.xlu0 %1803
        %1805 = vadd.xlane.f32.xlu0 %v1749
        %v1806 = vpop.xlane.xlu0 %1805
        %1807 = vadd.xlane.f32.xlu0 %v1750
        %v1808 = vpop.xlane.xlu0 %1807
        %1809 = vadd.xlane.f32.xlu0 %v1751
        %v1810 = vpop.xlane.xlu0 %1809
        %1811 = vadd.xlane.f32.xlu0 %v1752
        %v1812 = vpop.xlane.xlu0 %1811
        %1813 = vadd.xlane.f32.xlu0 %v1753
        %v1814 = vpop.xlane.xlu0 %1813
        %1815 = vadd.xlane.f32.xlu0 %v1754
        %v1816 = vpop.xlane.xlu0 %1815
        %1817 = vadd.xlane.f32.xlu0 %v1755
        %v1818 = vpop.xlane.xlu0 %1817
        %1819 = vadd.xlane.f32.xlu0 %v1756
        %v1820 = vpop.xlane.xlu0 %1819
        %1821 = vxpose.xlu0.b32.start [1/16] %v1758, 128
        %1822 = vxpose.xlu0.b32.cont [2/16] %v1760, 128
        %1823 = vxpose.xlu0.b32.cont [3/16] %v1762, 128
        %1824 = vxpose.xlu0.b32.cont [4/16] %v1764, 128
        %1825 = vxpose.xlu0.b32.cont [5/16] %v1766, 128
        %1826 = vxpose.xlu0.b32.cont [6/16] %v1768, 128
        %1827 = vxpose.xlu0.b32.cont [7/16] %v1770, 128
        %1828 = vxpose.xlu0.b32.cont [8/16] %v1772, 128
        %1829 = vxpose.xlu0.b32.cont [9/16] %v1774, 128
        %1830 = vxpose.xlu0.b32.cont [10/16] %v1776, 128
        %1831 = vxpose.xlu0.b32.cont [11/16] %v1778, 128
        %1832 = vxpose.xlu0.b32.cont [12/16] %v1780, 128
        %1833 = vxpose.xlu0.b32.cont [13/16] %v1782, 128
        %1834 = vxpose.xlu0.b32.cont [14/16] %v1784, 128
        %1835 = vxpose.xlu0.b32.cont [15/16] %v1786, 128
        %1836 = vxpose.xlu0.b32.end [16/16] %v1788, 128
        %v1837 = vpop.trf.xlu0
        %v1838 = vpop.trf.xlu0
        %v1839 = vpop.trf.xlu0
        %v1840 = vpop.trf.xlu0
        %v1841 = vpop.trf.xlu0
        %v1842 = vpop.trf.xlu0
        %v1843 = vpop.trf.xlu0
        %v1844 = vpop.trf.xlu0
        %v1845 = vpop.trf.xlu0
        %v1846 = vpop.trf.xlu0
        %v1847 = vpop.trf.xlu0
        %v1848 = vpop.trf.xlu0
        %v1849 = vpop.trf.xlu0
        %v1850 = vpop.trf.xlu0
        %v1851 = vpop.trf.xlu0
        %v1852 = vpop.trf.xlu0
        %1853 = vxpose.xlu0.b32.start [1/16] %v1790, 128
        %1854 = vxpose.xlu0.b32.cont [2/16] %v1792, 128
        %1855 = vxpose.xlu0.b32.cont [3/16] %v1794, 128
        %1856 = vxpose.xlu0.b32.cont [4/16] %v1796, 128
        %1857 = vxpose.xlu0.b32.cont [5/16] %v1798, 128
        %1858 = vxpose.xlu0.b32.cont [6/16] %v1800, 128
        %1859 = vxpose.xlu0.b32.cont [7/16] %v1802, 128
        %1860 = vxpose.xlu0.b32.cont [8/16] %v1804, 128
        %1861 = vxpose.xlu0.b32.cont [9/16] %v1806, 128
        %1862 = vxpose.xlu0.b32.cont [10/16] %v1808, 128
        %1863 = vxpose.xlu0.b32.cont [11/16] %v1810, 128
        %1864 = vxpose.xlu0.b32.cont [12/16] %v1812, 128
        %1865 = vxpose.xlu0.b32.cont [13/16] %v1814, 128
        %1866 = vxpose.xlu0.b32.cont [14/16] %v1816, 128
        %1867 = vxpose.xlu0.b32.cont [15/16] %v1818, 128
        %1868 = vxpose.xlu0.b32.end [16/16] %v1820, 128
        %v1869 = vpop.trf.xlu0
        %v1870 = vpop.trf.xlu0
        %v1871 = vpop.trf.xlu0
        %v1872 = vpop.trf.xlu0
        %v1873 = vpop.trf.xlu0
        %v1874 = vpop.trf.xlu0
        %v1875 = vpop.trf.xlu0
        %v1876 = vpop.trf.xlu0
        %v1877 = vpop.trf.xlu0
        %v1878 = vpop.trf.xlu0
        %v1879 = vpop.trf.xlu0
        %v1880 = vpop.trf.xlu0
        %v1881 = vpop.trf.xlu0
        %v1882 = vpop.trf.xlu0
        %v1883 = vpop.trf.xlu0
        %v1884 = vpop.trf.xlu0
        %v1885 = vrot.slane %v577, 5
        %v1887 = vadd.f32 %v1837, %v1885
        %v1888 = vadd.f32 %v1869, %v1885
        %v1891 = vcombine.low %v1887, %v1888
        %v1893 = vunpack.c.l.s4 1966171168
        %v1894 = vunpack.c.0.s8 %v1893
        %v1895 = vlaneseq
        %v1896 = vshrl.u32 %v1895, 7
        %v1897 = vsub.s32 %v1894, %v1896
        %v1898 = vrot.slane %v1891, %v1897
        %v1900 = vunpack.c.l.s4 1966171168
        %v1901 = vunpack.c.0.s8 %v1900
        %v1902 = vlaneseq
        %v1903 = vshrl.u32 %v1902, 7
        %v1904 = vsub.s32 %v1901, %v1903
        %v1905 = vrot.slane %v1898, %v1904
        %s1907 = scalar_lea.vmem %s277, 5 [#allocation9]
        %1908 = vst.msk [vmem:[%s1907] ss:$8 sm:$0x3] %vm602, %v1905
        %1909 = vst.msk [vmem:[%s1907] ss:$8 sm:$0x0] %vm602, %v1905
        %v1910 = vlaneseq
        %v1911 = vshrl.u32 %v1910, 7
        %v1912 = vsub.s32 6, %v1911
        %v1913 = vrot.slane %v320, %v1912
        %v1914 = vmul.f32 %v288, %v1913
        %v1915 = vmul.f32 %v289, %v1913
        %v1916 = vmul.f32 %v290, %v1913
        %v1917 = vmul.f32 %v291, %v1913
        %v1918 = vmul.f32 %v292, %v1913
        %v1919 = vmul.f32 %v293, %v1913
        %v1920 = vmul.f32 %v294, %v1913
        %v1921 = vmul.f32 %v295, %v1913
        %v1922 = vmul.f32 %v296, %v1913
        %v1923 = vmul.f32 %v297, %v1913
        %v1924 = vmul.f32 %v298, %v1913
        %v1925 = vmul.f32 %v299, %v1913
        %v1926 = vmul.f32 %v300, %v1913
        %v1927 = vmul.f32 %v301, %v1913
        %v1928 = vmul.f32 %v302, %v1913
        %v1929 = vmul.f32 %v303, %v1913
        %v1930 = vmul.f32 %v304, %v1913
        %v1931 = vmul.f32 %v305, %v1913
        %v1932 = vmul.f32 %v306, %v1913
        %v1933 = vmul.f32 %v307, %v1913
        %v1934 = vmul.f32 %v308, %v1913
        %v1935 = vmul.f32 %v309, %v1913
        %v1936 = vmul.f32 %v310, %v1913
        %v1937 = vmul.f32 %v311, %v1913
        %v1938 = vmul.f32 %v312, %v1913
        %v1939 = vmul.f32 %v313, %v1913
        %v1940 = vmul.f32 %v314, %v1913
        %v1941 = vmul.f32 %v315, %v1913
        %v1942 = vmul.f32 %v316, %v1913
        %v1943 = vmul.f32 %v317, %v1913
        %v1944 = vmul.f32 %v318, %v1913
        %v1945 = vmul.f32 %v319, %v1913
        %v1946 = vmax.f32 %v1914, 0.0
        %v1947 = vmax.f32 %v1915, 0.0
        %v1948 = vmax.f32 %v1916, 0.0
        %v1949 = vmax.f32 %v1917, 0.0
        %v1950 = vmax.f32 %v1918, 0.0
        %v1951 = vmax.f32 %v1919, 0.0
        %v1952 = vmax.f32 %v1920, 0.0
        %v1953 = vmax.f32 %v1921, 0.0
        %v1954 = vmax.f32 %v1922, 0.0
        %v1955 = vmax.f32 %v1923, 0.0
        %v1956 = vmax.f32 %v1924, 0.0
        %v1957 = vmax.f32 %v1925, 0.0
        %v1958 = vmax.f32 %v1926, 0.0
        %v1959 = vmax.f32 %v1927, 0.0
        %v1960 = vmax.f32 %v1928, 0.0
        %v1961 = vmax.f32 %v1929, 0.0
        %v1962 = vmax.f32 %v1930, 0.0
        %v1963 = vmax.f32 %v1931, 0.0
        %v1964 = vmax.f32 %v1932, 0.0
        %v1965 = vmax.f32 %v1933, 0.0
        %v1966 = vmax.f32 %v1934, 0.0
        %v1967 = vmax.f32 %v1935, 0.0
        %v1968 = vmax.f32 %v1936, 0.0
        %v1969 = vmax.f32 %v1937, 0.0
        %v1970 = vmax.f32 %v1938, 0.0
        %v1971 = vmax.f32 %v1939, 0.0
        %v1972 = vmax.f32 %v1940, 0.0
        %v1973 = vmax.f32 %v1941, 0.0
        %v1974 = vmax.f32 %v1942, 0.0
        %v1975 = vmax.f32 %v1943, 0.0
        %v1976 = vmax.f32 %v1944, 0.0
        %v1977 = vmax.f32 %v1945, 0.0
        %v1978 = vsel %vm393, %v398, %v395
        %v1979 = vsel %vm396, %v401, %v1978
        %v1980 = vsel %vm399, %v404, %v1979
        %v1981 = vsel %vm402, %v407, %v1980
        %v1982 = vsel %vm405, %v410, %v1981
        %v1983 = vsel %vm408, %v321, %v1982
        %v1984 = vsel %vm411, %v392, %v1983
        %v1986 = vmul.f32 %v1946, %v1984
        %v1987 = vmul.f32 %v1947, %v1984
        %v1988 = vmul.f32 %v1948, %v1984
        %v1989 = vmul.f32 %v1949, %v1984
        %v1990 = vmul.f32 %v1950, %v1984
        %v1991 = vmul.f32 %v1951, %v1984
        %v1992 = vmul.f32 %v1952, %v1984
        %v1993 = vmul.f32 %v1953, %v1984
        %v1994 = vmul.f32 %v1954, %v1984
        %v1995 = vmul.f32 %v1955, %v1984
        %v1996 = vmul.f32 %v1956, %v1984
        %v1997 = vmul.f32 %v1957, %v1984
        %v1998 = vmul.f32 %v1958, %v1984
        %v1999 = vmul.f32 %v1959, %v1984
        %v2000 = vmul.f32 %v1960, %v1984
        %v2001 = vmul.f32 %v1961, %v1984
        %v2002 = vmul.f32 %v1962, %v1984
        %v2003 = vmul.f32 %v1963, %v1984
        %v2004 = vmul.f32 %v1964, %v1984
        %v2005 = vmul.f32 %v1965, %v1984
        %v2006 = vmul.f32 %v1966, %v1984
        %v2007 = vmul.f32 %v1967, %v1984
        %v2008 = vmul.f32 %v1968, %v1984
        %v2009 = vmul.f32 %v1969, %v1984
        %v2010 = vmul.f32 %v1970, %v1984
        %v2011 = vmul.f32 %v1971, %v1984
        %v2012 = vmul.f32 %v1972, %v1984
        %v2013 = vmul.f32 %v1973, %v1984
        %v2014 = vmul.f32 %v1974, %v1984
        %v2015 = vmul.f32 %v1975, %v1984
        %v2016 = vmul.f32 %v1976, %v1984
        %v2017 = vmul.f32 %v1977, %v1984
        %2018 = vadd.xlane.f32.xlu0 %v1986
        %v2019 = vpop.xlane.xlu0 %2018
        %2020 = vadd.xlane.f32.xlu0 %v1987
        %v2021 = vpop.xlane.xlu0 %2020
        %2022 = vadd.xlane.f32.xlu0 %v1988
        %v2023 = vpop.xlane.xlu0 %2022
        %2024 = vadd.xlane.f32.xlu0 %v1989
        %v2025 = vpop.xlane.xlu0 %2024
        %2026 = vadd.xlane.f32.xlu0 %v1990
        %v2027 = vpop.xlane.xlu0 %2026
        %2028 = vadd.xlane.f32.xlu0 %v1991
        %v2029 = vpop.xlane.xlu0 %2028
        %2030 = vadd.xlane.f32.xlu0 %v1992
        %v2031 = vpop.xlane.xlu0 %2030
        %2032 = vadd.xlane.f32.xlu0 %v1993
        %v2033 = vpop.xlane.xlu0 %2032
        %2034 = vadd.xlane.f32.xlu0 %v1994
        %v2035 = vpop.xlane.xlu0 %2034
        %2036 = vadd.xlane.f32.xlu0 %v1995
        %v2037 = vpop.xlane.xlu0 %2036
        %2038 = vadd.xlane.f32.xlu0 %v1996
        %v2039 = vpop.xlane.xlu0 %2038
        %2040 = vadd.xlane.f32.xlu0 %v1997
        %v2041 = vpop.xlane.xlu0 %2040
        %2042 = vadd.xlane.f32.xlu0 %v1998
        %v2043 = vpop.xlane.xlu0 %2042
        %2044 = vadd.xlane.f32.xlu0 %v1999
        %v2045 = vpop.xlane.xlu0 %2044
        %2046 = vadd.xlane.f32.xlu0 %v2000
        %v2047 = vpop.xlane.xlu0 %2046
        %2048 = vadd.xlane.f32.xlu0 %v2001
        %v2049 = vpop.xlane.xlu0 %2048
        %2050 = vadd.xlane.f32.xlu0 %v2002
        %v2051 = vpop.xlane.xlu0 %2050
        %2052 = vadd.xlane.f32.xlu0 %v2003
        %v2053 = vpop.xlane.xlu0 %2052
        %2054 = vadd.xlane.f32.xlu0 %v2004
        %v2055 = vpop.xlane.xlu0 %2054
        %2056 = vadd.xlane.f32.xlu0 %v2005
        %v2057 = vpop.xlane.xlu0 %2056
        %2058 = vadd.xlane.f32.xlu0 %v2006
        %v2059 = vpop.xlane.xlu0 %2058
        %2060 = vadd.xlane.f32.xlu0 %v2007
        %v2061 = vpop.xlane.xlu0 %2060
        %2062 = vadd.xlane.f32.xlu0 %v2008
        %v2063 = vpop.xlane.xlu0 %2062
        %2064 = vadd.xlane.f32.xlu0 %v2009
        %v2065 = vpop.xlane.xlu0 %2064
        %2066 = vadd.xlane.f32.xlu0 %v2010
        %v2067 = vpop.xlane.xlu0 %2066
        %2068 = vadd.xlane.f32.xlu0 %v2011
        %v2069 = vpop.xlane.xlu0 %2068
        %2070 = vadd.xlane.f32.xlu0 %v2012
        %v2071 = vpop.xlane.xlu0 %2070
        %2072 = vadd.xlane.f32.xlu0 %v2013
        %v2073 = vpop.xlane.xlu0 %2072
        %2074 = vadd.xlane.f32.xlu0 %v2014
        %v2075 = vpop.xlane.xlu0 %2074
        %2076 = vadd.xlane.f32.xlu0 %v2015
        %v2077 = vpop.xlane.xlu0 %2076
        %2078 = vadd.xlane.f32.xlu0 %v2016
        %v2079 = vpop.xlane.xlu0 %2078
        %2080 = vadd.xlane.f32.xlu0 %v2017
        %v2081 = vpop.xlane.xlu0 %2080
        %2082 = vxpose.xlu0.b32.start [1/16] %v2019, 128
        %2083 = vxpose.xlu0.b32.cont [2/16] %v2021, 128
        %2084 = vxpose.xlu0.b32.cont [3/16] %v2023, 128
        %2085 = vxpose.xlu0.b32.cont [4/16] %v2025, 128
        %2086 = vxpose.xlu0.b32.cont [5/16] %v2027, 128
        %2087 = vxpose.xlu0.b32.cont [6/16] %v2029, 128
        %2088 = vxpose.xlu0.b32.cont [7/16] %v2031, 128
        %2089 = vxpose.xlu0.b32.cont [8/16] %v2033, 128
        %2090 = vxpose.xlu0.b32.cont [9/16] %v2035, 128
        %2091 = vxpose.xlu0.b32.cont [10/16] %v2037, 128
        %2092 = vxpose.xlu0.b32.cont [11/16] %v2039, 128
        %2093 = vxpose.xlu0.b32.cont [12/16] %v2041, 128
        %2094 = vxpose.xlu0.b32.cont [13/16] %v2043, 128
        %2095 = vxpose.xlu0.b32.cont [14/16] %v2045, 128
        %2096 = vxpose.xlu0.b32.cont [15/16] %v2047, 128
        %2097 = vxpose.xlu0.b32.end [16/16] %v2049, 128
        %v2098 = vpop.trf.xlu0
        %v2099 = vpop.trf.xlu0
        %v2100 = vpop.trf.xlu0
        %v2101 = vpop.trf.xlu0
        %v2102 = vpop.trf.xlu0
        %v2103 = vpop.trf.xlu0
        %v2104 = vpop.trf.xlu0
        %v2105 = vpop.trf.xlu0
        %v2106 = vpop.trf.xlu0
        %v2107 = vpop.trf.xlu0
        %v2108 = vpop.trf.xlu0
        %v2109 = vpop.trf.xlu0
        %v2110 = vpop.trf.xlu0
        %v2111 = vpop.trf.xlu0
        %v2112 = vpop.trf.xlu0
        %v2113 = vpop.trf.xlu0
        %2114 = vxpose.xlu0.b32.start [1/16] %v2051, 128
        %2115 = vxpose.xlu0.b32.cont [2/16] %v2053, 128
        %2116 = vxpose.xlu0.b32.cont [3/16] %v2055, 128
        %2117 = vxpose.xlu0.b32.cont [4/16] %v2057, 128
        %2118 = vxpose.xlu0.b32.cont [5/16] %v2059, 128
        %2119 = vxpose.xlu0.b32.cont [6/16] %v2061, 128
        %2120 = vxpose.xlu0.b32.cont [7/16] %v2063, 128
        %2121 = vxpose.xlu0.b32.cont [8/16] %v2065, 128
        %2122 = vxpose.xlu0.b32.cont [9/16] %v2067, 128
        %2123 = vxpose.xlu0.b32.cont [10/16] %v2069, 128
        %2124 = vxpose.xlu0.b32.cont [11/16] %v2071, 128
        %2125 = vxpose.xlu0.b32.cont [12/16] %v2073, 128
        %2126 = vxpose.xlu0.b32.cont [13/16] %v2075, 128
        %2127 = vxpose.xlu0.b32.cont [14/16] %v2077, 128
        %2128 = vxpose.xlu0.b32.cont [15/16] %v2079, 128
        %2129 = vxpose.xlu0.b32.end [16/16] %v2081, 128
        %v2130 = vpop.trf.xlu0
        %v2131 = vpop.trf.xlu0
        %v2132 = vpop.trf.xlu0
        %v2133 = vpop.trf.xlu0
        %v2134 = vpop.trf.xlu0
        %v2135 = vpop.trf.xlu0
        %v2136 = vpop.trf.xlu0
        %v2137 = vpop.trf.xlu0
        %v2138 = vpop.trf.xlu0
        %v2139 = vpop.trf.xlu0
        %v2140 = vpop.trf.xlu0
        %v2141 = vpop.trf.xlu0
        %v2142 = vpop.trf.xlu0
        %v2143 = vpop.trf.xlu0
        %v2144 = vpop.trf.xlu0
        %v2145 = vpop.trf.xlu0
        %v2146 = vrot.slane %v577, 6
        %v2148 = vadd.f32 %v2098, %v2146
        %v2149 = vadd.f32 %v2130, %v2146
        %v2152 = vcombine.low %v2148, %v2149
        %v2154 = vunpack.c.l.s4 1966171168
        %v2155 = vunpack.c.0.s8 %v2154
        %v2156 = vlaneseq
        %v2157 = vshrl.u32 %v2156, 7
        %v2158 = vsub.s32 %v2155, %v2157
        %v2159 = vrot.slane %v2152, %v2158
        %v2161 = vunpack.c.l.s4 1966171168
        %v2162 = vunpack.c.0.s8 %v2161
        %v2163 = vlaneseq
        %v2164 = vshrl.u32 %v2163, 7
        %v2165 = vsub.s32 %v2162, %v2164
        %v2166 = vrot.slane %v2159, %v2165
        %s2168 = scalar_lea.vmem %s277, 6 [#allocation9]
        %2169 = vst.msk [vmem:[%s2168] ss:$8 sm:$0x3] %vm602, %v2166
        %2170 = vst.msk [vmem:[%s2168] ss:$8 sm:$0x0] %vm602, %v2166
        %v2171 = vlaneseq
        %v2172 = vshrl.u32 %v2171, 7
        %v2173 = vsub.s32 7, %v2172
        %v2174 = vrot.slane %v320, %v2173
        %v2175 = vmul.f32 %v288, %v2174
        %v2176 = vmul.f32 %v289, %v2174
        %v2177 = vmul.f32 %v290, %v2174
        %v2178 = vmul.f32 %v291, %v2174
        %v2179 = vmul.f32 %v292, %v2174
        %v2180 = vmul.f32 %v293, %v2174
        %v2181 = vmul.f32 %v294, %v2174
        %v2182 = vmul.f32 %v295, %v2174
        %v2183 = vmul.f32 %v296, %v2174
        %v2184 = vmul.f32 %v297, %v2174
        %v2185 = vmul.f32 %v298, %v2174
        %v2186 = vmul.f32 %v299, %v2174
        %v2187 = vmul.f32 %v300, %v2174
        %v2188 = vmul.f32 %v301, %v2174
        %v2189 = vmul.f32 %v302, %v2174
        %v2190 = vmul.f32 %v303, %v2174
        %v2191 = vmul.f32 %v304, %v2174
        %v2192 = vmul.f32 %v305, %v2174
        %v2193 = vmul.f32 %v306, %v2174
        %v2194 = vmul.f32 %v307, %v2174
        %v2195 = vmul.f32 %v308, %v2174
        %v2196 = vmul.f32 %v309, %v2174
        %v2197 = vmul.f32 %v310, %v2174
        %v2198 = vmul.f32 %v311, %v2174
        %v2199 = vmul.f32 %v312, %v2174
        %v2200 = vmul.f32 %v313, %v2174
        %v2201 = vmul.f32 %v314, %v2174
        %v2202 = vmul.f32 %v315, %v2174
        %v2203 = vmul.f32 %v316, %v2174
        %v2204 = vmul.f32 %v317, %v2174
        %v2205 = vmul.f32 %v318, %v2174
        %v2206 = vmul.f32 %v319, %v2174
        %v2207 = vmax.f32 %v2175, 0.0
        %v2208 = vmax.f32 %v2176, 0.0
        %v2209 = vmax.f32 %v2177, 0.0
        %v2210 = vmax.f32 %v2178, 0.0
        %v2211 = vmax.f32 %v2179, 0.0
        %v2212 = vmax.f32 %v2180, 0.0
        %v2213 = vmax.f32 %v2181, 0.0
        %v2214 = vmax.f32 %v2182, 0.0
        %v2215 = vmax.f32 %v2183, 0.0
        %v2216 = vmax.f32 %v2184, 0.0
        %v2217 = vmax.f32 %v2185, 0.0
        %v2218 = vmax.f32 %v2186, 0.0
        %v2219 = vmax.f32 %v2187, 0.0
        %v2220 = vmax.f32 %v2188, 0.0
        %v2221 = vmax.f32 %v2189, 0.0
        %v2222 = vmax.f32 %v2190, 0.0
        %v2223 = vmax.f32 %v2191, 0.0
        %v2224 = vmax.f32 %v2192, 0.0
        %v2225 = vmax.f32 %v2193, 0.0
        %v2226 = vmax.f32 %v2194, 0.0
        %v2227 = vmax.f32 %v2195, 0.0
        %v2228 = vmax.f32 %v2196, 0.0
        %v2229 = vmax.f32 %v2197, 0.0
        %v2230 = vmax.f32 %v2198, 0.0
        %v2231 = vmax.f32 %v2199, 0.0
        %v2232 = vmax.f32 %v2200, 0.0
        %v2233 = vmax.f32 %v2201, 0.0
        %v2234 = vmax.f32 %v2202, 0.0
        %v2235 = vmax.f32 %v2203, 0.0
        %v2236 = vmax.f32 %v2204, 0.0
        %v2237 = vmax.f32 %v2205, 0.0
        %v2238 = vmax.f32 %v2206, 0.0
        %v2239 = vsel %vm393, %v395, %v392
        %v2240 = vsel %vm396, %v398, %v2239
        %v2241 = vsel %vm399, %v401, %v2240
        %v2242 = vsel %vm402, %v404, %v2241
        %v2243 = vsel %vm405, %v407, %v2242
        %v2244 = vsel %vm408, %v410, %v2243
        %v2245 = vsel %vm411, %v321, %v2244
        %v2247 = vmul.f32 %v2207, %v2245
        %v2248 = vmul.f32 %v2208, %v2245
        %v2249 = vmul.f32 %v2209, %v2245
        %v2250 = vmul.f32 %v2210, %v2245
        %v2251 = vmul.f32 %v2211, %v2245
        %v2252 = vmul.f32 %v2212, %v2245
        %v2253 = vmul.f32 %v2213, %v2245
        %v2254 = vmul.f32 %v2214, %v2245
        %v2255 = vmul.f32 %v2215, %v2245
        %v2256 = vmul.f32 %v2216, %v2245
        %v2257 = vmul.f32 %v2217, %v2245
        %v2258 = vmul.f32 %v2218, %v2245
        %v2259 = vmul.f32 %v2219, %v2245
        %v2260 = vmul.f32 %v2220, %v2245
        %v2261 = vmul.f32 %v2221, %v2245
        %v2262 = vmul.f32 %v2222, %v2245
        %v2263 = vmul.f32 %v2223, %v2245
        %v2264 = vmul.f32 %v2224, %v2245
        %v2265 = vmul.f32 %v2225, %v2245
        %v2266 = vmul.f32 %v2226, %v2245
        %v2267 = vmul.f32 %v2227, %v2245
        %v2268 = vmul.f32 %v2228, %v2245
        %v2269 = vmul.f32 %v2229, %v2245
        %v2270 = vmul.f32 %v2230, %v2245
        %v2271 = vmul.f32 %v2231, %v2245
        %v2272 = vmul.f32 %v2232, %v2245
        %v2273 = vmul.f32 %v2233, %v2245
        %v2274 = vmul.f32 %v2234, %v2245
        %v2275 = vmul.f32 %v2235, %v2245
        %v2276 = vmul.f32 %v2236, %v2245
        %v2277 = vmul.f32 %v2237, %v2245
        %v2278 = vmul.f32 %v2238, %v2245
        %2279 = vadd.xlane.f32.xlu0 %v2247
        %v2280 = vpop.xlane.xlu0 %2279
        %2281 = vadd.xlane.f32.xlu0 %v2248
        %v2282 = vpop.xlane.xlu0 %2281
        %2283 = vadd.xlane.f32.xlu0 %v2249
        %v2284 = vpop.xlane.xlu0 %2283
        %2285 = vadd.xlane.f32.xlu0 %v2250
        %v2286 = vpop.xlane.xlu0 %2285
        %2287 = vadd.xlane.f32.xlu0 %v2251
        %v2288 = vpop.xlane.xlu0 %2287
        %2289 = vadd.xlane.f32.xlu0 %v2252
        %v2290 = vpop.xlane.xlu0 %2289
        %2291 = vadd.xlane.f32.xlu0 %v2253
        %v2292 = vpop.xlane.xlu0 %2291
        %2293 = vadd.xlane.f32.xlu0 %v2254
        %v2294 = vpop.xlane.xlu0 %2293
        %2295 = vadd.xlane.f32.xlu0 %v2255
        %v2296 = vpop.xlane.xlu0 %2295
        %2297 = vadd.xlane.f32.xlu0 %v2256
        %v2298 = vpop.xlane.xlu0 %2297
        %2299 = vadd.xlane.f32.xlu0 %v2257
        %v2300 = vpop.xlane.xlu0 %2299
        %2301 = vadd.xlane.f32.xlu0 %v2258
        %v2302 = vpop.xlane.xlu0 %2301
        %2303 = vadd.xlane.f32.xlu0 %v2259
        %v2304 = vpop.xlane.xlu0 %2303
        %2305 = vadd.xlane.f32.xlu0 %v2260
        %v2306 = vpop.xlane.xlu0 %2305
        %2307 = vadd.xlane.f32.xlu0 %v2261
        %v2308 = vpop.xlane.xlu0 %2307
        %2309 = vadd.xlane.f32.xlu0 %v2262
        %v2310 = vpop.xlane.xlu0 %2309
        %2311 = vadd.xlane.f32.xlu0 %v2263
        %v2312 = vpop.xlane.xlu0 %2311
        %2313 = vadd.xlane.f32.xlu0 %v2264
        %v2314 = vpop.xlane.xlu0 %2313
        %2315 = vadd.xlane.f32.xlu0 %v2265
        %v2316 = vpop.xlane.xlu0 %2315
        %2317 = vadd.xlane.f32.xlu0 %v2266
        %v2318 = vpop.xlane.xlu0 %2317
        %2319 = vadd.xlane.f32.xlu0 %v2267
        %v2320 = vpop.xlane.xlu0 %2319
        %2321 = vadd.xlane.f32.xlu0 %v2268
        %v2322 = vpop.xlane.xlu0 %2321
        %2323 = vadd.xlane.f32.xlu0 %v2269
        %v2324 = vpop.xlane.xlu0 %2323
        %2325 = vadd.xlane.f32.xlu0 %v2270
        %v2326 = vpop.xlane.xlu0 %2325
        %2327 = vadd.xlane.f32.xlu0 %v2271
        %v2328 = vpop.xlane.xlu0 %2327
        %2329 = vadd.xlane.f32.xlu0 %v2272
        %v2330 = vpop.xlane.xlu0 %2329
        %2331 = vadd.xlane.f32.xlu0 %v2273
        %v2332 = vpop.xlane.xlu0 %2331
        %2333 = vadd.xlane.f32.xlu0 %v2274
        %v2334 = vpop.xlane.xlu0 %2333
        %2335 = vadd.xlane.f32.xlu0 %v2275
        %v2336 = vpop.xlane.xlu0 %2335
        %2337 = vadd.xlane.f32.xlu0 %v2276
        %v2338 = vpop.xlane.xlu0 %2337
        %2339 = vadd.xlane.f32.xlu0 %v2277
        %v2340 = vpop.xlane.xlu0 %2339
        %2341 = vadd.xlane.f32.xlu0 %v2278
        %v2342 = vpop.xlane.xlu0 %2341
        %2343 = vxpose.xlu0.b32.start [1/16] %v2280, 128
        %2344 = vxpose.xlu0.b32.cont [2/16] %v2282, 128
        %2345 = vxpose.xlu0.b32.cont [3/16] %v2284, 128
        %2346 = vxpose.xlu0.b32.cont [4/16] %v2286, 128
        %2347 = vxpose.xlu0.b32.cont [5/16] %v2288, 128
        %2348 = vxpose.xlu0.b32.cont [6/16] %v2290, 128
        %2349 = vxpose.xlu0.b32.cont [7/16] %v2292, 128
        %2350 = vxpose.xlu0.b32.cont [8/16] %v2294, 128
        %2351 = vxpose.xlu0.b32.cont [9/16] %v2296, 128
        %2352 = vxpose.xlu0.b32.cont [10/16] %v2298, 128
        %2353 = vxpose.xlu0.b32.cont [11/16] %v2300, 128
        %2354 = vxpose.xlu0.b32.cont [12/16] %v2302, 128
        %2355 = vxpose.xlu0.b32.cont [13/16] %v2304, 128
        %2356 = vxpose.xlu0.b32.cont [14/16] %v2306, 128
        %2357 = vxpose.xlu0.b32.cont [15/16] %v2308, 128
        %2358 = vxpose.xlu0.b32.end [16/16] %v2310, 128
        %v2359 = vpop.trf.xlu0
        %v2360 = vpop.trf.xlu0
        %v2361 = vpop.trf.xlu0
        %v2362 = vpop.trf.xlu0
        %v2363 = vpop.trf.xlu0
        %v2364 = vpop.trf.xlu0
        %v2365 = vpop.trf.xlu0
        %v2366 = vpop.trf.xlu0
        %v2367 = vpop.trf.xlu0
        %v2368 = vpop.trf.xlu0
        %v2369 = vpop.trf.xlu0
        %v2370 = vpop.trf.xlu0
        %v2371 = vpop.trf.xlu0
        %v2372 = vpop.trf.xlu0
        %v2373 = vpop.trf.xlu0
        %v2374 = vpop.trf.xlu0
        %2375 = vxpose.xlu0.b32.start [1/16] %v2312, 128
        %2376 = vxpose.xlu0.b32.cont [2/16] %v2314, 128
        %2377 = vxpose.xlu0.b32.cont [3/16] %v2316, 128
        %2378 = vxpose.xlu0.b32.cont [4/16] %v2318, 128
        %2379 = vxpose.xlu0.b32.cont [5/16] %v2320, 128
        %2380 = vxpose.xlu0.b32.cont [6/16] %v2322, 128
        %2381 = vxpose.xlu0.b32.cont [7/16] %v2324, 128
        %2382 = vxpose.xlu0.b32.cont [8/16] %v2326, 128
        %2383 = vxpose.xlu0.b32.cont [9/16] %v2328, 128
        %2384 = vxpose.xlu0.b32.cont [10/16] %v2330, 128
        %2385 = vxpose.xlu0.b32.cont [11/16] %v2332, 128
        %2386 = vxpose.xlu0.b32.cont [12/16] %v2334, 128
        %2387 = vxpose.xlu0.b32.cont [13/16] %v2336, 128
        %2388 = vxpose.xlu0.b32.cont [14/16] %v2338, 128
        %2389 = vxpose.xlu0.b32.cont [15/16] %v2340, 128
        %2390 = vxpose.xlu0.b32.end [16/16] %v2342, 128
        %v2391 = vpop.trf.xlu0
        %v2392 = vpop.trf.xlu0
        %v2393 = vpop.trf.xlu0
        %v2394 = vpop.trf.xlu0
        %v2395 = vpop.trf.xlu0
        %v2396 = vpop.trf.xlu0
        %v2397 = vpop.trf.xlu0
        %v2398 = vpop.trf.xlu0
        %v2399 = vpop.trf.xlu0
        %v2400 = vpop.trf.xlu0
        %v2401 = vpop.trf.xlu0
        %v2402 = vpop.trf.xlu0
        %v2403 = vpop.trf.xlu0
        %v2404 = vpop.trf.xlu0
        %v2405 = vpop.trf.xlu0
        %v2406 = vpop.trf.xlu0
        %v2407 = vrot.slane %v577, 7
        %v2409 = vadd.f32 %v2359, %v2407
        %v2410 = vadd.f32 %v2391, %v2407
        %v2413 = vcombine.low %v2409, %v2410
        %v2415 = vunpack.c.l.s4 1966171168
        %v2416 = vunpack.c.0.s8 %v2415
        %v2417 = vlaneseq
        %v2418 = vshrl.u32 %v2417, 7
        %v2419 = vsub.s32 %v2416, %v2418
        %v2420 = vrot.slane %v2413, %v2419
        %v2422 = vunpack.c.l.s4 1966171168
        %v2423 = vunpack.c.0.s8 %v2422
        %v2424 = vlaneseq
        %v2425 = vshrl.u32 %v2424, 7
        %v2426 = vsub.s32 %v2423, %v2425
        %v2427 = vrot.slane %v2420, %v2426
        %s2429 = scalar_lea.vmem %s277, 7 [#allocation9]
        %2430 = vst.msk [vmem:[%s2429] ss:$8 sm:$0x3] %vm602, %v2427
        %2431 = vst.msk [vmem:[%s2429] ss:$8 sm:$0x0] %vm602, %v2427
        %s2432 = sand.u32 %s150, 1
        %s2433 = scalar_lea.sflag [#allocation6], %s2432
        %s2434 = sand.u32 %s150, 1
        %s2435 = smul.addr %s2434, 16
        %s2436 = scalar_lea.vmem [#allocation9], %s2435
        // Predicated region
        $region45: #{tpu_custom_call.1} parent=35 // pred_check
          %p2437 = pneg %p160
        $region46: #{tpu_custom_call.1} parent=35 // pred_check_branch
          %2439 = sbr.rel (%p2437) target = $region48
        $region47: #{tpu_custom_call.1} parent=35 // pred_region
          %s2440 = smul.u32 2, %s28
          %s2442 = ssub.s32 256, 256
          %2443 = vsyncadd %s2433, %s2442
          %s2444 = smul.addr %s29, 2
          %s2445 = sadd.s32 %s2440, %s2444
          %s2446 = smul.addr %s2445, 128
          %s2447 = scalar_lea.hbm %s5, %s2446
          %s2449 = sshll.u32 %s2436, 4
          %s2450 = int_to_ptr.vmem [resolvable:$true] %s2449
          %2452 = dma.vmem_to_hbm [thread:$0]  %s2450, 256, %s2447, %s2433
        $region48: #{tpu_custom_call.1} parent=35 // pred_fallthru
          _
      $region36: #{tpu_custom_call.1} parent=5 // pred_fallthru
        _
      %p2453 = scmp.le.s32.totalorder 2, %s19
      // Predicated region
      $region49: #{tpu_custom_call.1} parent=5 // pred_check
        %p2454 = pneg %p2453
      $region50: #{tpu_custom_call.1} parent=5 // pred_check_branch
        %2456 = sbr.rel (%p2454) target = $region52
      $region51: #{tpu_custom_call.1} parent=5 // pred_region
        %s2457 = ssub.s32 %s19, 2
        // Predicated region
        $region53: #{tpu_custom_call.1} parent=51 // pred_check
          %p2458 = pneg %p166
        $region54: #{tpu_custom_call.1} parent=51 // pred_check_branch
          %2460 = sbr.rel (%p2458) target = $region56
        $region55: #{tpu_custom_call.1} parent=51 // pred_region
          %s2461 = sand.u32 %s151, 1
          %s2462 = scalar_lea.sflag [#allocation6], %s2461
          %s2463 = sand.u32 %s151, 1
          %s2464 = smul.addr %s2463, 16
          %s2465 = scalar_lea.vmem [#allocation9], %s2464
          %2466 = dma.done %s2462, 256
        $region56: #{tpu_custom_call.1} parent=51 // pred_fallthru
          _
      $region52: #{tpu_custom_call.1} parent=5 // pred_fallthru
        _
    $region6: #{tpu_custom_call.1} parent=1 // loop_footer
      %s23 = sadd.s32 1, %s19
    $region7: #{tpu_custom_call.1} parent=1 // loop_footer_branch
      %18 = sbr.rel target = $region3
    $region8: #{tpu_custom_call.1} parent=1 // loop_exit
      _
    %2467 = vsyncpa [#allocation5], 1
    %s2468 = scalar_lea.sflag [#allocation5], 1
    %2469 = vsyncpa %s2468, 1
    %2470 = vsyncpa [#allocation8], 1
    %s2471 = scalar_lea.sflag [#allocation8], 1
    %2472 = vsyncpa %s2471, 1
    %2473 = vsyncpa [#allocation6], 1
    %s2474 = scalar_lea.sflag [#allocation6], 1
    %2475 = vsyncpa %s2474, 1

</llo_original>
